<compile_context>
chip_gen: v7x
topology: tpu7x:2x2x1
jax: 0.10.0
libtpu: 0.0.40
codegen_flags: <defaults>
</compile_context>

<pallas_src>
import functools

import jax
import jax.numpy as jnp
from jax.experimental import pallas as pl
from jax.experimental.pallas import tpu as pltpu


def _cdiv(a: int, b: int) -> int:
    return (a + b - 1) // b


def _round_up(n: int, m: int) -> int:
    return _cdiv(n, m) * m


def _mlp_kernel(x_ref, w1_ref, b1_ref, w2_ref, b2_ref, w3_ref, b3_ref, o_ref):
    # Activations enter the MXU in bf16; accumulate / bias-add / ReLU in f32.
    x = x_ref[...].astype(jnp.bfloat16)                                   # (TB, in_pad)
    h1 = jnp.dot(x, w1_ref[...], preferred_element_type=jnp.float32)     # (TB, 1024) f32
    h1 = jnp.maximum(h1 + b1_ref[...], 0.0)
    h2 = jnp.dot(h1.astype(jnp.bfloat16), w2_ref[...],
                 preferred_element_type=jnp.float32)                      # (TB, 512) f32
    h2 = jnp.maximum(h2 + b2_ref[...], 0.0)
    o = jnp.dot(h2.astype(jnp.bfloat16), w3_ref[...],
                preferred_element_type=jnp.float32)                       # (TB, out_pad) f32
    o_ref[...] = (o + b3_ref[...]).astype(o_ref.dtype)


@functools.partial(jax.jit,
                   static_argnames=("num_actions", "batch_tile", "min_tiles"))
def network_forward(x, params, *, num_actions, batch_tile=1024, min_tiles=1):
    """Forward pass of the CartPole Network.

    x:       (B, input_dim) float32
    params:  dict from init_params (weights bf16, pre-padded; biases f32)
    returns: (B, num_actions) float32
    """
    B, in_dim = x.shape
    in_pad, fc1_dims = params["w1"].shape
    fc2_dims, out_pad = params["w3"].shape

    # Batch tiling that minimizes padding.  min_tiles>=2 (v7x) ensures the
    # "parallel" batch axis actually splits across both TensorCores.
    ntiles = _cdiv(B, batch_tile)
    if B >= 16 * min_tiles:
        ntiles = max(ntiles, min_tiles)
    tb = _round_up(_cdiv(B, ntiles), 8)
    b_pad = ntiles * tb

    pad_b = b_pad - B
    pad_k = in_pad - in_dim
    x_p = x if (pad_b == 0 and pad_k == 0) else jnp.pad(x, ((0, pad_b), (0, pad_k)))

    # Weights/biases: constant block index -> DMA'd once, VMEM-resident across
    # the grid; single-buffered (no point double-buffering a constant block).
    def resident(shape):
        return pl.BlockSpec(shape, lambda i: (0, 0), pipeline_mode=pl.Buffered(1))

    out = pl.pallas_call(
        _mlp_kernel,
        out_shape=jax.ShapeDtypeStruct((b_pad, out_pad), jnp.float32),
        grid=(ntiles,),
        in_specs=[
            pl.BlockSpec((tb, in_pad), lambda i: (i, 0)),   # x tiles stream through
            resident((in_pad, fc1_dims)),
            resident((1, fc1_dims)),
            resident((fc1_dims, fc2_dims)),
            resident((1, fc2_dims)),
            resident((fc2_dims, out_pad)),
            resident((1, out_pad)),
        ],
        out_specs=pl.BlockSpec((tb, out_pad), lambda i: (i, 0)),
        compiler_params=pltpu.CompilerParams(
            dimension_semantics=("parallel",)),   # v7x: shard batch over 2 TCs
    )(x_p, params["w1"], params["b1"], params["w2"], params["b2"],
      params["w3"], params["b3"])

    return out[:B, :num_actions]


def init_params(key, input_dim, num_actions, fc1_dims=1024, fc2_dims=512):
    """PyTorch-style uniform(-1/sqrt(fan_in), 1/sqrt(fan_in)) init.

    Weights are stored bf16 (MXU-native), biases f32.  Padding is applied
    once here (in_dim -> multiple of 8, num_actions -> multiple of 128) so
    the forward pass never pads weights per call.
    """
    ks = jax.random.split(key, 6)
    in_pad = _round_up(input_dim, 8)
    out_pad = _round_up(num_actions, 128)

    def uniform(k, shape, fan_in, dtype):
        bound = 1.0 / jnp.sqrt(float(fan_in))
        return jax.random.uniform(k, shape, jnp.float32, -bound, bound).astype(dtype)

    w1 = uniform(ks[0], (input_dim, fc1_dims), input_dim, jnp.bfloat16)
    w3 = uniform(ks[4], (fc2_dims, num_actions), fc2_dims, jnp.bfloat16)
    b3 = uniform(ks[5], (1, num_actions), fc2_dims, jnp.float32)

    return {
        "w1": jnp.pad(w1, ((0, in_pad - input_dim), (0, 0))),
        "b1": uniform(ks[1], (1, fc1_dims), input_dim, jnp.float32),
        "w2": uniform(ks[2], (fc1_dims, fc2_dims), fc1_dims, jnp.bfloat16),
        "b2": uniform(ks[3], (1, fc2_dims), fc1_dims, jnp.float32),
        "w3": jnp.pad(w3, ((0, 0), (0, out_pad - num_actions))),
        "b3": jnp.pad(b3, ((0, 0), (0, out_pad - num_actions))),
    }


def _reference(x, params, num_actions):
    """Pure-JAX reference with the same mixed-precision recipe as the kernel."""
    in_pad = params["w1"].shape[0]
    xp = jnp.pad(x, ((0, 0), (0, in_pad - x.shape[1])))
    xb = xp.astype(jnp.bfloat16)
    h1 = jnp.maximum(
        jnp.dot(xb, params["w1"], preferred_element_type=jnp.float32) + params["b1"], 0.0)
    h2 = jnp.maximum(
        jnp.dot(h1.astype(jnp.bfloat16), params["w2"],
                preferred_element_type=jnp.float32) + params["b2"], 0.0)
    o = jnp.dot(h2.astype(jnp.bfloat16), params["w3"],
                preferred_element_type=jnp.float32) + params["b3"]
    return o[:, :num_actions]


if __name__ == "__main__":
    key = jax.random.PRNGKey(0)
    k_params, k_x, k_xb = jax.random.split(key, 3)

    # CartPole-v1: observation dim = 4, numActions = 2.
    input_dim, num_actions, batch = 4, 2, 2
    params = init_params(k_params, input_dim, num_actions)

    # Small per-step call (original CartPole shapes).
    x = jax.random.normal(k_x, (batch, input_dim), jnp.float32)
    out = jax.block_until_ready(network_forward(x, params, num_actions=num_actions))
    ref = _reference(x, params, num_actions)
    assert out.shape == (batch, num_actions)
    assert jnp.allclose(out, ref, atol=1e-3, rtol=1e-3)

    # Batched call: single large tile (tb=520, zero batch padding).
    xb = jax.random.normal(k_xb, (520, input_dim), jnp.float32)
    outb = jax.block_until_ready(network_forward(xb, params, num_actions=num_actions))
    refb = _reference(xb, params, num_actions)
    assert outb.shape == (520, num_actions)
    assert jnp.allclose(outb, refb, atol=1e-3, rtol=1e-3)

    # Multi-tile path (e.g. v7x dual-TC usage): >=2 balanced batch tiles.
    outc = jax.block_until_ready(
        network_forward(xb, params, num_actions=num_actions,
                        batch_tile=256, min_tiles=2))
    assert outc.shape == (520, num_actions)
    assert jnp.allclose(outc, refb, atol=1e-3, rtol=1e-3)

    print("KERNEL_OK")
</pallas_src>

<mosaic_0001>
module attributes {stable_mosaic.version = 11 : i64} {
  func.func @_mlp_kernel(%arg0: i32, %arg1: memref<8x8xf32, #tpu.memory_space<vmem>>, %arg2: memref<8x1024xbf16, #tpu.memory_space<vmem>>, %arg3: memref<1x1024xf32, #tpu.memory_space<vmem>>, %arg4: memref<1024x512xbf16, #tpu.memory_space<vmem>>, %arg5: memref<1x512xf32, #tpu.memory_space<vmem>>, %arg6: memref<512x128xbf16, #tpu.memory_space<vmem>>, %arg7: memref<1x128xf32, #tpu.memory_space<vmem>>, %arg8: memref<8x128xf32, #tpu.memory_space<vmem>>) attributes {dimension_semantics = [#tpu.dimension_semantics<parallel>], iteration_bounds = array<i64: 1>, scalar_prefetch = 0 : i64, scratch_operands = 0 : i64, tpu.core_type = #tpu.core_type<tc>, window_params = [{transform_indices = @transform_0, window_bounds = array<i64: 8, 8>}, {pipeline_mode = #tpu.pipeline_mode<synchronous>, transform_indices = @transform_1, window_bounds = array<i64: 8, 1024>}, {pipeline_mode = #tpu.pipeline_mode<synchronous>, transform_indices = @transform_2, window_bounds = array<i64: 1, 1024>}, {pipeline_mode = #tpu.pipeline_mode<synchronous>, transform_indices = @transform_3, window_bounds = array<i64: 1024, 512>}, {pipeline_mode = #tpu.pipeline_mode<synchronous>, transform_indices = @transform_4, window_bounds = array<i64: 1, 512>}, {pipeline_mode = #tpu.pipeline_mode<synchronous>, transform_indices = @transform_5, window_bounds = array<i64: 512, 128>}, {pipeline_mode = #tpu.pipeline_mode<synchronous>, transform_indices = @transform_6, window_bounds = array<i64: 1, 128>}, {transform_indices = @transform_7, window_bounds = array<i64: 8, 128>}]} {
    %c0 = arith.constant 0 : index
    %c0_0 = arith.constant 0 : index
    %0 = vector.load %arg1[%c0, %c0_0] : memref<8x8xf32, #tpu.memory_space<vmem>>, vector<8x8xf32>
    %1 = arith.truncf %0 : vector<8x8xf32> to vector<8x8xbf16>
    %c0_1 = arith.constant 0 : index
    %c0_2 = arith.constant 0 : index
    %2 = vector.load %arg2[%c0_1, %c0_2] : memref<8x1024xbf16, #tpu.memory_space<vmem>>, vector<8x1024xbf16>
    %cst = arith.constant dense<0.000000e+00> : vector<8x1024xf32>
    %3 = tpu.matmul %1, %2, %cst {dimension_numbers = #tpu.dot_dimension_numbers<[1], [0], [0], [1], [0, 0, 1, 1], [], []>} : vector<8x8xbf16>, vector<8x1024xbf16>, vector<8x1024xf32> -> vector<8x1024xf32>
    %c0_3 = arith.constant 0 : index
    %c0_4 = arith.constant 0 : index
    %4 = vector.load %arg3[%c0_3, %c0_4] : memref<1x1024xf32, #tpu.memory_space<vmem>>, vector<1x1024xf32>
    %5 = vector.broadcast %4 : vector<1x1024xf32> to vector<8x1024xf32>
    %6 = arith.addf %3, %5 : vector<8x1024xf32>
    %cst_5 = arith.constant 0.000000e+00 : f32
    %7 = vector.broadcast %cst_5 : f32 to vector<8x1024xf32>
    %8 = arith.maximumf %6, %7 : vector<8x1024xf32>
    %9 = arith.truncf %8 : vector<8x1024xf32> to vector<8x1024xbf16>
    %c0_6 = arith.constant 0 : index
    %c0_7 = arith.constant 0 : index
    %10 = vector.load %arg4[%c0_6, %c0_7] : memref<1024x512xbf16, #tpu.memory_space<vmem>>, vector<1024x512xbf16>
    %cst_8 = arith.constant dense<0.000000e+00> : vector<8x512xf32>
    %11 = tpu.matmul %9, %10, %cst_8 {dimension_numbers = #tpu.dot_dimension_numbers<[1], [0], [0], [1], [0, 0, 1, 1], [], []>} : vector<8x1024xbf16>, vector<1024x512xbf16>, vector<8x512xf32> -> vector<8x512xf32>
    %c0_9 = arith.constant 0 : index
    %c0_10 = arith.constant 0 : index
    %12 = vector.load %arg5[%c0_9, %c0_10] : memref<1x512xf32, #tpu.memory_space<vmem>>, vector<1x512xf32>
    %13 = vector.broadcast %12 : vector<1x512xf32> to vector<8x512xf32>
    %14 = arith.addf %11, %13 : vector<8x512xf32>
    %cst_11 = arith.constant 0.000000e+00 : f32
    %15 = vector.broadcast %cst_11 : f32 to vector<8x512xf32>
    %16 = arith.maximumf %14, %15 : vector<8x512xf32>
    %17 = arith.truncf %16 : vector<8x512xf32> to vector<8x512xbf16>
    %c0_12 = arith.constant 0 : index
    %c0_13 = arith.constant 0 : index
    %18 = vector.load %arg6[%c0_12, %c0_13] : memref<512x128xbf16, #tpu.memory_space<vmem>>, vector<512x128xbf16>
    %cst_14 = arith.constant dense<0.000000e+00> : vector<8x128xf32>
    %19 = tpu.matmul %17, %18, %cst_14 {dimension_numbers = #tpu.dot_dimension_numbers<[1], [0], [0], [1], [0, 0, 1, 1], [], []>} : vector<8x512xbf16>, vector<512x128xbf16>, vector<8x128xf32> -> vector<8x128xf32>
    %c0_15 = arith.constant 0 : index
    %c0_16 = arith.constant 0 : index
    %20 = vector.load %arg7[%c0_15, %c0_16] : memref<1x128xf32, #tpu.memory_space<vmem>>, vector<1x128xf32>
    %21 = vector.broadcast %20 : vector<1x128xf32> to vector<8x128xf32>
    %22 = arith.addf %19, %21 : vector<8x128xf32>
    %c0_17 = arith.constant 0 : index
    %c0_18 = arith.constant 0 : index
    %23 = vector.load %arg8[%c0_17, %c0_18] : memref<8x128xf32, #tpu.memory_space<vmem>>, vector<8x128xf32>
    tpu.vector_store %arg8[%c0_17, %c0_18], %22 {strides = array<i32>} : memref<8x128xf32, #tpu.memory_space<vmem>>, vector<8x128xf32>,
    return
  }
  func.func @transform_0(%arg0: i32) -> (i32, i32) {
    %c0_i32 = arith.constant 0 : i32
    %c0_i32_0 = arith.constant 0 : i32
    return %arg0, %c0_i32 : i32, i32
  }
  func.func @transform_1(%arg0: i32) -> (i32, i32) {
    %c0_i32 = arith.constant 0 : i32
    %c0_i32_0 = arith.constant 0 : i32
    %c0_i32_1 = arith.constant 0 : i32
    return %c0_i32, %c0_i32_0 : i32, i32
  }
  func.func @transform_2(%arg0: i32) -> (i32, i32) {
    %c0_i32 = arith.constant 0 : i32
    %c0_i32_0 = arith.constant 0 : i32
    %c0_i32_1 = arith.constant 0 : i32
    return %c0_i32, %c0_i32_0 : i32, i32
  }
  func.func @transform_3(%arg0: i32) -> (i32, i32) {
    %c0_i32 = arith.constant 0 : i32
    %c0_i32_0 = arith.constant 0 : i32
    %c0_i32_1 = arith.constant 0 : i32
    return %c0_i32, %c0_i32_0 : i32, i32
  }
  func.func @transform_4(%arg0: i32) -> (i32, i32) {
    %c0_i32 = arith.constant 0 : i32
    %c0_i32_0 = arith.constant 0 : i32
    %c0_i32_1 = arith.constant 0 : i32
    return %c0_i32, %c0_i32_0 : i32, i32
  }
  func.func @transform_5(%arg0: i32) -> (i32, i32) {
    %c0_i32 = arith.constant 0 : i32
    %c0_i32_0 = arith.constant 0 : i32
    %c0_i32_1 = arith.constant 0 : i32
    return %c0_i32, %c0_i32_0 : i32, i32
  }
  func.func @transform_6(%arg0: i32) -> (i32, i32) {
    %c0_i32 = arith.constant 0 : i32
    %c0_i32_0 = arith.constant 0 : i32
    %c0_i32_1 = arith.constant 0 : i32
    return %c0_i32, %c0_i32_0 : i32, i32
  }
  func.func @transform_7(%arg0: i32) -> (i32, i32) {
    %c0_i32 = arith.constant 0 : i32
    %c0_i32_0 = arith.constant 0 : i32
    return %arg0, %c0_i32 : i32, i32
  }
}

</mosaic_0001>

<llo_original>
// kernel: network_forward.1
$region0: #{network_forward.1}
  #allocation0 [shape = 'u32[]', space=smem, size = 0x4, offset = 0x4, fixed_abs, tag = 'smem constant byte address 0x4 - core index']
  #allocation1 [shape = 'u32[144,128]{1,0:T(1,128)}', space=vmem, size = 0x12000, scoped, tag = 'internal scratch']
  %s0 = inlined_call_operand.vmem [shape: f32[8,8], index: 0, kind: input, shape index: {}]
  %s1 = inlined_call_operand.hbm [shape: bf16[8,1024], index: 1, kind: input, shape index: {}]
  %s2 = inlined_call_operand.vmem [shape: f32[1,1024], index: 2, kind: input, shape index: {}]
  %s3 = inlined_call_operand.hbm [shape: bf16[1024,512], index: 3, kind: input, shape index: {}]
  %s4 = inlined_call_operand.vmem [shape: f32[1,512], index: 4, kind: input, shape index: {}]
  %s5 = inlined_call_operand.hbm [shape: bf16[512,128], index: 5, kind: input, shape index: {}]
  %s6 = inlined_call_operand.vmem [shape: f32[1,128], index: 6, kind: input, shape index: {}]
  %s7 = inlined_call_operand.vmem [shape: f32[8,128], index: 7, kind: output, shape index: {}]
  %s8 = sld [smem:[#allocation0]]
  $region50: #{network_forward.1} parent=0
    _
  %s10 = ssub.s32 1, %s8
  %s11 = scalar_select 0, %s10, %s8
  $region1: #{network_forward.1} parent=0
    #allocation2 [shape = 'u8[16384]{0}', space=vmem, size = 0x4000, scoped, tag = 'input window, operand 1, single buffered']
    #allocation3 [shape = 's32[1]{0}', space=sflag, size = 0x4, scoped, tag = 'scoped memory for network_forward.1']
    #allocation4 [shape = 'u8[1048576]{0}', space=vmem, size = 0x100000, scoped, tag = 'input window, operand 3, single buffered']
    #allocation5 [shape = 's32[1]{0}', space=sflag, size = 0x4, scoped, tag = 'scoped memory for network_forward.1']
    #allocation6 [shape = 'u8[131072]{0}', space=vmem, size = 0x20000, scoped, tag = 'input window, operand 5, single buffered']
    %12 = vsyncpa [#allocation3], 0
    %13 = vsyncpa [#allocation5], 0
    // Predicated region
    $region2: #{network_forward.1} parent=1 // pred_check
      _
    $region3: #{network_forward.1} parent=1 // pred_check_branch
      %15 = sbr.rel (0) target = $region5
    $region4: #{network_forward.1} parent=1 // pred_region
      _
    $region5: #{network_forward.1} parent=1 // pred_fallthru
      _
    // Predicated region
    $region6: #{network_forward.1} parent=1 // pred_check
      _
    $region7: #{network_forward.1} parent=1 // pred_check_branch
      %17 = sbr.rel (0) target = $region9
    $region8: #{network_forward.1} parent=1 // pred_region
      %s19 = ssub.s32 512, 512
      %20 = vsyncadd [#allocation3], %s19
      %s22 = sshll.u32 [#allocation2], 4
      %s23 = int_to_ptr.vmem [resolvable:$true] %s22
      %25 = dma.hbm_to_vmem [thread:$0]  %s1, 512, %s23, [#allocation3]
    $region9: #{network_forward.1} parent=1 // pred_fallthru
      _
    // Predicated region
    $region10: #{network_forward.1} parent=1 // pred_check
      _
    $region11: #{network_forward.1} parent=1 // pred_check_branch
      %27 = sbr.rel (0) target = $region13
    $region12: #{network_forward.1} parent=1 // pred_region
      _
    $region13: #{network_forward.1} parent=1 // pred_fallthru
      _
    // Predicated region
    $region14: #{network_forward.1} parent=1 // pred_check
      _
    $region15: #{network_forward.1} parent=1 // pred_check_branch
      %29 = sbr.rel (0) target = $region17
    $region16: #{network_forward.1} parent=1 // pred_region
      %s31 = ssub.s32 32768, 32768
      %32 = vsyncadd [#allocation5], %s31
      %s33 = sshll.u32 [#allocation4], 4
      %s34 = int_to_ptr.vmem [resolvable:$true] %s33
      %39 = dma.hbm_to_vmem [thread:$0]  %s3, 32768, %s34, [#allocation5], 256, 256, 16
    $region17: #{network_forward.1} parent=1 // pred_fallthru
      _
    // Predicated region
    $region18: #{network_forward.1} parent=1 // pred_check
      _
    $region19: #{network_forward.1} parent=1 // pred_check_branch
      %41 = sbr.rel (0) target = $region21
    $region20: #{network_forward.1} parent=1 // pred_region
      _
    $region21: #{network_forward.1} parent=1 // pred_fallthru
      _
    // Predicated region
    $region22: #{network_forward.1} parent=1 // pred_check
      _
    $region23: #{network_forward.1} parent=1 // pred_check_branch
      %43 = sbr.rel (0) target = $region25
    $region24: #{network_forward.1} parent=1 // pred_region
      %s45 = ssub.s32 4096, 4096
      %46 = vsyncadd [#allocation5], %s45
      %s47 = sshll.u32 [#allocation6], 4
      %s48 = int_to_ptr.vmem [resolvable:$true] %s47
      %53 = dma.hbm_to_vmem [thread:$0]  %s5, 4096, %s48, [#allocation5], 64, 64, 4
    $region25: #{network_forward.1} parent=1 // pred_fallthru
      _
    // Predicated region
    $region26: #{network_forward.1} parent=1 // pred_check
      _
    $region27: #{network_forward.1} parent=1 // pred_check_branch
      %55 = sbr.rel (0) target = $region29
    $region28: #{network_forward.1} parent=1 // pred_region
      _
    $region29: #{network_forward.1} parent=1 // pred_fallthru
      _
    // Predicated region
    $region30: #{network_forward.1} parent=1 // pred_check
      _
    $region31: #{network_forward.1} parent=1 // pred_check_branch
      %57 = sbr.rel (0) target = $region33
    $region32: #{network_forward.1} parent=1 // pred_region
      %58 = dma.done [#allocation3], 512
    $region33: #{network_forward.1} parent=1 // pred_fallthru
      _
    // Predicated region
    $region34: #{network_forward.1} parent=1 // pred_check
      _
    $region35: #{network_forward.1} parent=1 // pred_check_branch
      %60 = sbr.rel (0) target = $region37
    $region36: #{network_forward.1} parent=1 // pred_region
      %61 = dma.done [#allocation5], 32768
    $region37: #{network_forward.1} parent=1 // pred_fallthru
      _
    // Predicated region
    $region38: #{network_forward.1} parent=1 // pred_check
      _
    $region39: #{network_forward.1} parent=1 // pred_check_branch
      %63 = sbr.rel (0) target = $region41
    $region40: #{network_forward.1} parent=1 // pred_region
      %64 = dma.done [#allocation5], 4096
    $region41: #{network_forward.1} parent=1 // pred_fallthru
      _
    %v66 = vld [vmem:[%s0] sm:$0xff]
    %v67 = vpack.c.bf16 %v66, %v66
    %v68 = vld [vmem:[#allocation2] sm:$0xff]
    %v69 = vld [vmem:[#allocation2 + $0x8] sm:$0xff]
    %v70 = vld [vmem:[#allocation2 + $0x10] sm:$0xff]
    %v71 = vld [vmem:[#allocation2 + $0x18] sm:$0xff]
    %v72 = vld [vmem:[%s2] sm:$0xff]
    %v74 = vlaneseq
    %v75 = vshrl.u32 %v74, 7
    %v76 = vsub.s32 0, %v75
    %v77 = vrot.slane %v72, %v76
    %v78 = vlaneseq
    %v79 = vshrl.u32 %v78, 7
    %v80 = vsub.s32 1, %v79
    %v81 = vrot.slane %v72, %v80
    %v82 = vlaneseq
    %v83 = vshrl.u32 %v82, 7
    %v84 = vsub.s32 2, %v83
    %v85 = vrot.slane %v72, %v84
    %v86 = vlaneseq
    %v87 = vshrl.u32 %v86, 7
    %v88 = vsub.s32 3, %v87
    %v89 = vrot.slane %v72, %v88
    %v90 = vlaneseq
    %v91 = vshrl.u32 %v90, 7
    %v92 = vsub.s32 4, %v91
    %v93 = vrot.slane %v72, %v92
    %v94 = vlaneseq
    %v95 = vshrl.u32 %v94, 7
    %v96 = vsub.s32 5, %v95
    %v97 = vrot.slane %v72, %v96
    %v98 = vlaneseq
    %v99 = vshrl.u32 %v98, 7
    %v100 = vsub.s32 6, %v99
    %v101 = vrot.slane %v72, %v100
    %v102 = vlaneseq
    %v103 = vshrl.u32 %v102, 7
    %v104 = vsub.s32 7, %v103
    %v105 = vrot.slane %v72, %v104
    %v118 = vunpack.c.l.b16 %v68
    %v119 = vunpack.c.h.b16 %v68
    %v120 = vunpack.c.l.b16 %v69
    %v121 = vunpack.c.h.b16 %v69
    %v122 = vunpack.c.l.b16 %v70
    %v123 = vunpack.c.h.b16 %v70
    %v124 = vunpack.c.l.b16 %v71
    %v125 = vunpack.c.h.b16 %v71
    %v126 = vpack.c.b16 %v118, %v118
    %v127 = vpack.c.b16 %v119, %v119
    %v128 = vpack.c.b16 %v120, %v120
    %v129 = vpack.c.b16 %v121, %v121
    %v130 = vpack.c.b16 %v122, %v122
    %v131 = vpack.c.b16 %v123, %v123
    %v132 = vpack.c.b16 %v124, %v124
    %v133 = vpack.c.b16 %v125, %v125
    %vm134 = vcmask 64512
    %v136 = vsel %vm134, %v67, 0
    %vm138 = vcmask 1043456
    %v140 = vsel %vm138, %v126, 0
    %v143 = vsel %vm138, %v127, 0
    %v146 = vsel %vm138, %v128, 0
    %v149 = vsel %vm138, %v129, 0
    %v152 = vsel %vm138, %v130, 0
    %v155 = vsel %vm138, %v131, 0
    %v158 = vsel %vm138, %v132, 0
    %v161 = vsel %vm138, %v133, 0
    %163 = vmatprep.subr.bf16.mxu0 %v143
    %164 = vmatpush1.bf16.msra.mxu0 %v140
    %165 = vmatprep.subr.bf16.mxu0 0
    %166 = vmatpush1.bf16.msra.mxu0 0
    %167 = vmatprep.subr.bf16.mxu0 0
    %168 = vmatpush1.bf16.msra.mxu0 0
    %169 = vmatprep.subr.bf16.mxu0 0
    %170 = vmatpush1.bf16.msra.mxu0 0
    %171 = vmatprep.subr.bf16.mxu0 0
    %172 = vmatpush1.bf16.msra.mxu0 0
    %173 = vmatprep.subr.bf16.mxu0 0
    %174 = vmatpush1.bf16.msra.mxu0 0
    %175 = vmatprep.subr.bf16.mxu0 0
    %176 = vmatpush1.bf16.msra.mxu0 0
    %177 = vmatprep.subr.bf16.mxu0 0
    %178 = vmatpush1.bf16.msra.mxu0 0
    %179 = vmatprep.subr.bf16.mxu0 0
    %180 = vmatpush1.bf16.msra.mxu0 0
    %181 = vmatprep.subr.bf16.mxu0 0
    %182 = vmatpush1.bf16.msra.mxu0 0
    %183 = vmatprep.subr.bf16.mxu0 0
    %184 = vmatpush1.bf16.msra.mxu0 0
    %185 = vmatprep.subr.bf16.mxu0 0
    %186 = vmatpush1.bf16.msra.mxu0 0
    %187 = vmatprep.subr.bf16.mxu0 0
    %188 = vmatpush1.bf16.msra.mxu0 0
    %189 = vmatprep.subr.bf16.mxu0 0
    %190 = vmatpush1.bf16.msra.mxu0 0
    %191 = vmatprep.subr.bf16.mxu0 0
    %192 = vmatpush1.bf16.msra.mxu0 0
    %193 = vmatprep.subr.bf16.mxu0 0
    %194 = vmatpush1.bf16.msra.mxu0 0
    %195 = vmatprep.mubr.bf16.mxu0 0
    %196 = vmatmul.mubr.bf16.gmra.mrb[0].mxu0 %v136
    %v197 = vpop.f32.mrb[0].mxu0
    %v198 = vadd.f32 %v77, %v197
    %v199 = vpop.f32.mrb[0].mxu0
    %v200 = vadd.f32 %v81, %v199
    %v201 = vpop.f32.mrb[0].mxu0
    %v202 = vpop.f32.mrb[0].mxu0
    %203 = vdwg.mxu0
    %204 = vmatprep.subr.bf16.mxu0 %v149
    %205 = vmatpush1.bf16.msra.mxu0 %v146
    %206 = vmatprep.subr.bf16.mxu0 0
    %207 = vmatpush1.bf16.msra.mxu0 0
    %208 = vmatprep.subr.bf16.mxu0 0
    %209 = vmatpush1.bf16.msra.mxu0 0
    %210 = vmatprep.subr.bf16.mxu0 0
    %211 = vmatpush1.bf16.msra.mxu0 0
    %212 = vmatprep.subr.bf16.mxu0 0
    %213 = vmatpush1.bf16.msra.mxu0 0
    %214 = vmatprep.subr.bf16.mxu0 0
    %215 = vmatpush1.bf16.msra.mxu0 0
    %216 = vmatprep.subr.bf16.mxu0 0
    %217 = vmatpush1.bf16.msra.mxu0 0
    %218 = vmatprep.subr.bf16.mxu0 0
    %219 = vmatpush1.bf16.msra.mxu0 0
    %220 = vmatprep.subr.bf16.mxu0 0
    %221 = vmatpush1.bf16.msra.mxu0 0
    %222 = vmatprep.subr.bf16.mxu0 0
    %223 = vmatpush1.bf16.msra.mxu0 0
    %224 = vmatprep.subr.bf16.mxu0 0
    %225 = vmatpush1.bf16.msra.mxu0 0
    %226 = vmatprep.subr.bf16.mxu0 0
    %227 = vmatpush1.bf16.msra.mxu0 0
    %228 = vmatprep.subr.bf16.mxu0 0
    %229 = vmatpush1.bf16.msra.mxu0 0
    %230 = vmatprep.subr.bf16.mxu0 0
    %231 = vmatpush1.bf16.msra.mxu0 0
    %232 = vmatprep.subr.bf16.mxu0 0
    %233 = vmatpush1.bf16.msra.mxu0 0
    %234 = vmatprep.subr.bf16.mxu0 0
    %235 = vmatpush1.bf16.msra.mxu0 0
    %236 = vmatprep.mubr.bf16.mxu0 0
    %237 = vmatmul.mubr.bf16.gmra.mrb[0].mxu0 %v136
    %v238 = vpop.f32.mrb[0].mxu0
    %v239 = vadd.f32 %v85, %v238
    %v240 = vpop.f32.mrb[0].mxu0
    %v241 = vadd.f32 %v89, %v240
    %v242 = vpop.f32.mrb[0].mxu0
    %v243 = vpop.f32.mrb[0].mxu0
    %244 = vdwg.mxu0
    %245 = vmatprep.subr.bf16.mxu0 %v155
    %246 = vmatpush1.bf16.msra.mxu0 %v152
    %247 = vmatprep.subr.bf16.mxu0 0
    %248 = vmatpush1.bf16.msra.mxu0 0
    %249 = vmatprep.subr.bf16.mxu0 0
    %250 = vmatpush1.bf16.msra.mxu0 0
    %251 = vmatprep.subr.bf16.mxu0 0
    %252 = vmatpush1.bf16.msra.mxu0 0
    %253 = vmatprep.subr.bf16.mxu0 0
    %254 = vmatpush1.bf16.msra.mxu0 0
    %255 = vmatprep.subr.bf16.mxu0 0
    %256 = vmatpush1.bf16.msra.mxu0 0
    %257 = vmatprep.subr.bf16.mxu0 0
    %258 = vmatpush1.bf16.msra.mxu0 0
    %259 = vmatprep.subr.bf16.mxu0 0
    %260 = vmatpush1.bf16.msra.mxu0 0
    %261 = vmatprep.subr.bf16.mxu0 0
    %262 = vmatpush1.bf16.msra.mxu0 0
    %263 = vmatprep.subr.bf16.mxu0 0
    %264 = vmatpush1.bf16.msra.mxu0 0
    %265 = vmatprep.subr.bf16.mxu0 0
    %266 = vmatpush1.bf16.msra.mxu0 0
    %267 = vmatprep.subr.bf16.mxu0 0
    %268 = vmatpush1.bf16.msra.mxu0 0
    %269 = vmatprep.subr.bf16.mxu0 0
    %270 = vmatpush1.bf16.msra.mxu0 0
    %271 = vmatprep.subr.bf16.mxu0 0
    %272 = vmatpush1.bf16.msra.mxu0 0
    %273 = vmatprep.subr.bf16.mxu0 0
    %274 = vmatpush1.bf16.msra.mxu0 0
    %275 = vmatprep.subr.bf16.mxu0 0
    %276 = vmatpush1.bf16.msra.mxu0 0
    %277 = vmatprep.mubr.bf16.mxu0 0
    %278 = vmatmul.mubr.bf16.gmra.mrb[0].mxu0 %v136
    %v279 = vpop.f32.mrb[0].mxu0
    %v280 = vadd.f32 %v93, %v279
    %v281 = vpop.f32.mrb[0].mxu0
    %v282 = vadd.f32 %v97, %v281
    %v283 = vpop.f32.mrb[0].mxu0
    %v284 = vpop.f32.mrb[0].mxu0
    %285 = vdwg.mxu0
    %286 = vmatprep.subr.bf16.mxu0 %v161
    %287 = vmatpush1.bf16.msra.mxu0 %v158
    %288 = vmatprep.subr.bf16.mxu0 0
    %289 = vmatpush1.bf16.msra.mxu0 0
    %290 = vmatprep.subr.bf16.mxu0 0
    %291 = vmatpush1.bf16.msra.mxu0 0
    %292 = vmatprep.subr.bf16.mxu0 0
    %293 = vmatpush1.bf16.msra.mxu0 0
    %294 = vmatprep.subr.bf16.mxu0 0
    %295 = vmatpush1.bf16.msra.mxu0 0
    %296 = vmatprep.subr.bf16.mxu0 0
    %297 = vmatpush1.bf16.msra.mxu0 0
    %298 = vmatprep.subr.bf16.mxu0 0
    %299 = vmatpush1.bf16.msra.mxu0 0
    %300 = vmatprep.subr.bf16.mxu0 0
    %301 = vmatpush1.bf16.msra.mxu0 0
    %302 = vmatprep.subr.bf16.mxu0 0
    %303 = vmatpush1.bf16.msra.mxu0 0
    %304 = vmatprep.subr.bf16.mxu0 0
    %305 = vmatpush1.bf16.msra.mxu0 0
    %306 = vmatprep.subr.bf16.mxu0 0
    %307 = vmatpush1.bf16.msra.mxu0 0
    %308 = vmatprep.subr.bf16.mxu0 0
    %309 = vmatpush1.bf16.msra.mxu0 0
    %310 = vmatprep.subr.bf16.mxu0 0
    %311 = vmatpush1.bf16.msra.mxu0 0
    %312 = vmatprep.subr.bf16.mxu0 0
    %313 = vmatpush1.bf16.msra.mxu0 0
    %314 = vmatprep.subr.bf16.mxu0 0
    %315 = vmatpush1.bf16.msra.mxu0 0
    %316 = vmatprep.subr.bf16.mxu0 0
    %317 = vmatpush1.bf16.msra.mxu0 0
    %318 = vmatprep.mubr.bf16.mxu0 0
    %319 = vmatmul.mubr.bf16.gmra.mrb[0].mxu0 %v136
    %v320 = vpop.f32.mrb[0].mxu0
    %v321 = vadd.f32 %v101, %v320
    %v322 = vpop.f32.mrb[0].mxu0
    %v323 = vadd.f32 %v105, %v322
    %v324 = vpop.f32.mrb[0].mxu0
    %v325 = vpop.f32.mrb[0].mxu0
    %326 = vdwg.mxu0
    %v327 = vmax.f32 %v198, 0.0
    %v328 = vmax.f32 %v200, 0.0
    %v329 = vmax.f32 %v239, 0.0
    %v330 = vmax.f32 %v241, 0.0
    %v331 = vmax.f32 %v280, 0.0
    %v332 = vmax.f32 %v282, 0.0
    %v333 = vmax.f32 %v321, 0.0
    %v334 = vmax.f32 %v323, 0.0
    %v335 = vpack.c.bf16 %v327, %v327
    %v336 = vpack.c.bf16 %v328, %v328
    %v337 = vpack.c.bf16 %v329, %v329
    %v338 = vpack.c.bf16 %v330, %v330
    %v339 = vpack.c.bf16 %v331, %v331
    %v340 = vpack.c.bf16 %v332, %v332
    %v341 = vpack.c.bf16 %v333, %v333
    %v342 = vpack.c.bf16 %v334, %v334
    %v343 = vld [vmem:[#allocation4] sm:$0xff]
    %v344 = vld [vmem:[#allocation4 + $0x8] sm:$0xff]
    %v345 = vld [vmem:[#allocation4 + $0x10] sm:$0xff]
    %v346 = vld [vmem:[#allocation4 + $0x18] sm:$0xff]
    %v347 = vld [vmem:[#allocation4 + $0x20] sm:$0xff]
    %v348 = vld [vmem:[#allocation4 + $0x28] sm:$0xff]
    %v349 = vld [vmem:[#allocation4 + $0x30] sm:$0xff]
    %v350 = vld [vmem:[#allocation4 + $0x38] sm:$0xff]
    %v351 = vld [vmem:[#allocation4 + $0x40] sm:$0xff]
    %v352 = vld [vmem:[#allocation4 + $0x48] sm:$0xff]
    %v353 = vld [vmem:[#allocation4 + $0x50] sm:$0xff]
    %v354 = vld [vmem:[#allocation4 + $0x58] sm:$0xff]
    %v355 = vld [vmem:[#allocation4 + $0x60] sm:$0xff]
    %v356 = vld [vmem:[#allocation4 + $0x68] sm:$0xff]
    %v357 = vld [vmem:[#allocation4 + $0x70] sm:$0xff]
    %v358 = vld [vmem:[#allocation4 + $0x78] sm:$0xff]
    %v359 = vld [vmem:[#allocation4 + $0x80] sm:$0xff]
    %v360 = vld [vmem:[#allocation4 + $0x88] sm:$0xff]
    %v361 = vld [vmem:[#allocation4 + $0x90] sm:$0xff]
    %v362 = vld [vmem:[#allocation4 + $0x98] sm:$0xff]
    %v363 = vld [vmem:[#allocation4 + $0xa0] sm:$0xff]
    %v364 = vld [vmem:[#allocation4 + $0xa8] sm:$0xff]
    %v365 = vld [vmem:[#allocation4 + $0xb0] sm:$0xff]
    %v366 = vld [vmem:[#allocation4 + $0xb8] sm:$0xff]
    %v367 = vld [vmem:[#allocation4 + $0xc0] sm:$0xff]
    %v368 = vld [vmem:[#allocation4 + $0xc8] sm:$0xff]
    %v369 = vld [vmem:[#allocation4 + $0xd0] sm:$0xff]
    %v370 = vld [vmem:[#allocation4 + $0xd8] sm:$0xff]
    %v371 = vld [vmem:[#allocation4 + $0xe0] sm:$0xff]
    %v372 = vld [vmem:[#allocation4 + $0xe8] sm:$0xff]
    %v373 = vld [vmem:[#allocation4 + $0xf0] sm:$0xff]
    %v374 = vld [vmem:[#allocation4 + $0xf8] sm:$0xff]
    %v375 = vld [vmem:[#allocation4 + $0x100] sm:$0xff]
    %v376 = vld [vmem:[#allocation4 + $0x108] sm:$0xff]
    %v377 = vld [vmem:[#allocation4 + $0x110] sm:$0xff]
    %v378 = vld [vmem:[#allocation4 + $0x118] sm:$0xff]
    %v379 = vld [vmem:[#allocation4 + $0x120] sm:$0xff]
    %v380 = vld [vmem:[#allocation4 + $0x128] sm:$0xff]
    %v381 = vld [vmem:[#allocation4 + $0x130] sm:$0xff]
    %v382 = vld [vmem:[#allocation4 + $0x138] sm:$0xff]
    %v383 = vld [vmem:[#allocation4 + $0x140] sm:$0xff]
    %v384 = vld [vmem:[#allocation4 + $0x148] sm:$0xff]
    %v385 = vld [vmem:[#allocation4 + $0x150] sm:$0xff]
    %v386 = vld [vmem:[#allocation4 + $0x158] sm:$0xff]
    %v387 = vld [vmem:[#allocation4 + $0x160] sm:$0xff]
    %v388 = vld [vmem:[#allocation4 + $0x168] sm:$0xff]
    %v389 = vld [vmem:[#allocation4 + $0x170] sm:$0xff]
    %v390 = vld [vmem:[#allocation4 + $0x178] sm:$0xff]
    %v391 = vld [vmem:[#allocation4 + $0x180] sm:$0xff]
    %v392 = vld [vmem:[#allocation4 + $0x188] sm:$0xff]
    %v393 = vld [vmem:[#allocation4 + $0x190] sm:$0xff]
    %v394 = vld [vmem:[#allocation4 + $0x198] sm:$0xff]
    %v395 = vld [vmem:[#allocation4 + $0x1a0] sm:$0xff]
    %v396 = vld [vmem:[#allocation4 + $0x1a8] sm:$0xff]
    %v397 = vld [vmem:[#allocation4 + $0x1b0] sm:$0xff]
    %v398 = vld [vmem:[#allocation4 + $0x1b8] sm:$0xff]
    %v399 = vld [vmem:[#allocation4 + $0x1c0] sm:$0xff]
    %v400 = vld [vmem:[#allocation4 + $0x1c8] sm:$0xff]
    %v401 = vld [vmem:[#allocation4 + $0x1d0] sm:$0xff]
    %v402 = vld [vmem:[#allocation4 + $0x1d8] sm:$0xff]
    %v403 = vld [vmem:[#allocation4 + $0x1e0] sm:$0xff]
    %v404 = vld [vmem:[#allocation4 + $0x1e8] sm:$0xff]
    %v405 = vld [vmem:[#allocation4 + $0x1f0] sm:$0xff]
    %v406 = vld [vmem:[#allocation4 + $0x1f8] sm:$0xff]
    %v407 = vld [vmem:[#allocation4 + $0x200] sm:$0xff]
    %v408 = vld [vmem:[#allocation4 + $0x208] sm:$0xff]
    %v409 = vld [vmem:[#allocation4 + $0x210] sm:$0xff]
    %v410 = vld [vmem:[#allocation4 + $0x218] sm:$0xff]
    %v411 = vld [vmem:[#allocation4 + $0x220] sm:$0xff]
    %v412 = vld [vmem:[#allocation4 + $0x228] sm:$0xff]
    %v413 = vld [vmem:[#allocation4 + $0x230] sm:$0xff]
    %v414 = vld [vmem:[#allocation4 + $0x238] sm:$0xff]
    %v415 = vld [vmem:[#allocation4 + $0x240] sm:$0xff]
    %v416 = vld [vmem:[#allocation4 + $0x248] sm:$0xff]
    %v417 = vld [vmem:[#allocation4 + $0x250] sm:$0xff]
    %v418 = vld [vmem:[#allocation4 + $0x258] sm:$0xff]
    %v419 = vld [vmem:[#allocation4 + $0x260] sm:$0xff]
    %v420 = vld [vmem:[#allocation4 + $0x268] sm:$0xff]
    %v421 = vld [vmem:[#allocation4 + $0x270] sm:$0xff]
    %v422 = vld [vmem:[#allocation4 + $0x278] sm:$0xff]
    %v423 = vld [vmem:[#allocation4 + $0x280] sm:$0xff]
    %v424 = vld [vmem:[#allocation4 + $0x288] sm:$0xff]
    %v425 = vld [vmem:[#allocation4 + $0x290] sm:$0xff]
    %v426 = vld [vmem:[#allocation4 + $0x298] sm:$0xff]
    %v427 = vld [vmem:[#allocation4 + $0x2a0] sm:$0xff]
    %v428 = vld [vmem:[#allocation4 + $0x2a8] sm:$0xff]
    %v429 = vld [vmem:[#allocation4 + $0x2b0] sm:$0xff]
    %v430 = vld [vmem:[#allocation4 + $0x2b8] sm:$0xff]
    %v431 = vld [vmem:[#allocation4 + $0x2c0] sm:$0xff]
    %v432 = vld [vmem:[#allocation4 + $0x2c8] sm:$0xff]
    %v433 = vld [vmem:[#allocation4 + $0x2d0] sm:$0xff]
    %v434 = vld [vmem:[#allocation4 + $0x2d8] sm:$0xff]
    %v435 = vld [vmem:[#allocation4 + $0x2e0] sm:$0xff]
    %v436 = vld [vmem:[#allocation4 + $0x2e8] sm:$0xff]
    %v437 = vld [vmem:[#allocation4 + $0x2f0] sm:$0xff]
    %v438 = vld [vmem:[#allocation4 + $0x2f8] sm:$0xff]
    %v439 = vld [vmem:[#allocation4 + $0x300] sm:$0xff]
    %v440 = vld [vmem:[#allocation4 + $0x308] sm:$0xff]
    %v441 = vld [vmem:[#allocation4 + $0x310] sm:$0xff]
    %v442 = vld [vmem:[#allocation4 + $0x318] sm:$0xff]
    %v443 = vld [vmem:[#allocation4 + $0x320] sm:$0xff]
    %v444 = vld [vmem:[#allocation4 + $0x328] sm:$0xff]
    %v445 = vld [vmem:[#allocation4 + $0x330] sm:$0xff]
    %v446 = vld [vmem:[#allocation4 + $0x338] sm:$0xff]
    %v447 = vld [vmem:[#allocation4 + $0x340] sm:$0xff]
    %v448 = vld [vmem:[#allocation4 + $0x348] sm:$0xff]
    %v449 = vld [vmem:[#allocation4 + $0x350] sm:$0xff]
    %v450 = vld [vmem:[#allocation4 + $0x358] sm:$0xff]
    %v451 = vld [vmem:[#allocation4 + $0x360] sm:$0xff]
    %v452 = vld [vmem:[#allocation4 + $0x368] sm:$0xff]
    %v453 = vld [vmem:[#allocation4 + $0x370] sm:$0xff]
    %v454 = vld [vmem:[#allocation4 + $0x378] sm:$0xff]
    %v455 = vld [vmem:[#allocation4 + $0x380] sm:$0xff]
    %v456 = vld [vmem:[#allocation4 + $0x388] sm:$0xff]
    %v457 = vld [vmem:[#allocation4 + $0x390] sm:$0xff]
    %v458 = vld [vmem:[#allocation4 + $0x398] sm:$0xff]
    %v459 = vld [vmem:[#allocation4 + $0x3a0] sm:$0xff]
    %v460 = vld [vmem:[#allocation4 + $0x3a8] sm:$0xff]
    %v461 = vld [vmem:[#allocation4 + $0x3b0] sm:$0xff]
    %v462 = vld [vmem:[#allocation4 + $0x3b8] sm:$0xff]
    %v463 = vld [vmem:[#allocation4 + $0x3c0] sm:$0xff]
    %v464 = vld [vmem:[#allocation4 + $0x3c8] sm:$0xff]
    %v465 = vld [vmem:[#allocation4 + $0x3d0] sm:$0xff]
    %v466 = vld [vmem:[#allocation4 + $0x3d8] sm:$0xff]
    %v467 = vld [vmem:[#allocation4 + $0x3e0] sm:$0xff]
    %v468 = vld [vmem:[#allocation4 + $0x3e8] sm:$0xff]
    %v469 = vld [vmem:[#allocation4 + $0x3f0] sm:$0xff]
    %v470 = vld [vmem:[#allocation4 + $0x3f8] sm:$0xff]
    %v471 = vld [vmem:[#allocation4 + $0x400] sm:$0xff]
    %v472 = vld [vmem:[#allocation4 + $0x408] sm:$0xff]
    %v473 = vld [vmem:[#allocation4 + $0x410] sm:$0xff]
    %v474 = vld [vmem:[#allocation4 + $0x418] sm:$0xff]
    %v475 = vld [vmem:[#allocation4 + $0x420] sm:$0xff]
    %v476 = vld [vmem:[#allocation4 + $0x428] sm:$0xff]
    %v477 = vld [vmem:[#allocation4 + $0x430] sm:$0xff]
    %v478 = vld [vmem:[#allocation4 + $0x438] sm:$0xff]
    %v479 = vld [vmem:[#allocation4 + $0x440] sm:$0xff]
    %v480 = vld [vmem:[#allocation4 + $0x448] sm:$0xff]
    %v481 = vld [vmem:[#allocation4 + $0x450] sm:$0xff]
    %v482 = vld [vmem:[#allocation4 + $0x458] sm:$0xff]
    %v483 = vld [vmem:[#allocation4 + $0x460] sm:$0xff]
    %v484 = vld [vmem:[#allocation4 + $0x468] sm:$0xff]
    %v485 = vld [vmem:[#allocation4 + $0x470] sm:$0xff]
    %v486 = vld [vmem:[#allocation4 + $0x478] sm:$0xff]
    %v487 = vld [vmem:[#allocation4 + $0x480] sm:$0xff]
    %v488 = vld [vmem:[#allocation4 + $0x488] sm:$0xff]
    %v489 = vld [vmem:[#allocation4 + $0x490] sm:$0xff]
    %v490 = vld [vmem:[#allocation4 + $0x498] sm:$0xff]
    %v491 = vld [vmem:[#allocation4 + $0x4a0] sm:$0xff]
    %v492 = vld [vmem:[#allocation4 + $0x4a8] sm:$0xff]
    %v493 = vld [vmem:[#allocation4 + $0x4b0] sm:$0xff]
    %v494 = vld [vmem:[#allocation4 + $0x4b8] sm:$0xff]
    %v495 = vld [vmem:[#allocation4 + $0x4c0] sm:$0xff]
    %v496 = vld [vmem:[#allocation4 + $0x4c8] sm:$0xff]
    %v497 = vld [vmem:[#allocation4 + $0x4d0] sm:$0xff]
    %v498 = vld [vmem:[#allocation4 + $0x4d8] sm:$0xff]
    %v499 = vld [vmem:[#allocation4 + $0x4e0] sm:$0xff]
    %v500 = vld [vmem:[#allocation4 + $0x4e8] sm:$0xff]
    %v501 = vld [vmem:[#allocation4 + $0x4f0] sm:$0xff]
    %v502 = vld [vmem:[#allocation4 + $0x4f8] sm:$0xff]
    %v503 = vld [vmem:[#allocation4 + $0x500] sm:$0xff]
    %v504 = vld [vmem:[#allocation4 + $0x508] sm:$0xff]
    %v505 = vld [vmem:[#allocation4 + $0x510] sm:$0xff]
    %v506 = vld [vmem:[#allocation4 + $0x518] sm:$0xff]
    %v507 = vld [vmem:[#allocation4 + $0x520] sm:$0xff]
    %v508 = vld [vmem:[#allocation4 + $0x528] sm:$0xff]
    %v509 = vld [vmem:[#allocation4 + $0x530] sm:$0xff]
    %v510 = vld [vmem:[#allocation4 + $0x538] sm:$0xff]
    %v511 = vld [vmem:[#allocation4 + $0x540] sm:$0xff]
    %v512 = vld [vmem:[#allocation4 + $0x548] sm:$0xff]
    %v513 = vld [vmem:[#allocation4 + $0x550] sm:$0xff]
    %v514 = vld [vmem:[#allocation4 + $0x558] sm:$0xff]
    %v515 = vld [vmem:[#allocation4 + $0x560] sm:$0xff]
    %v516 = vld [vmem:[#allocation4 + $0x568] sm:$0xff]
    %v517 = vld [vmem:[#allocation4 + $0x570] sm:$0xff]
    %v518 = vld [vmem:[#allocation4 + $0x578] sm:$0xff]
    %v519 = vld [vmem:[#allocation4 + $0x580] sm:$0xff]
    %v520 = vld [vmem:[#allocation4 + $0x588] sm:$0xff]
    %v521 = vld [vmem:[#allocation4 + $0x590] sm:$0xff]
    %v522 = vld [vmem:[#allocation4 + $0x598] sm:$0xff]
    %v523 = vld [vmem:[#allocation4 + $0x5a0] sm:$0xff]
    %v524 = vld [vmem:[#allocation4 + $0x5a8] sm:$0xff]
    %v525 = vld [vmem:[#allocation4 + $0x5b0] sm:$0xff]
    %v526 = vld [vmem:[#allocation4 + $0x5b8] sm:$0xff]
    %v527 = vld [vmem:[#allocation4 + $0x5c0] sm:$0xff]
    %v528 = vld [vmem:[#allocation4 + $0x5c8] sm:$0xff]
    %v529 = vld [vmem:[#allocation4 + $0x5d0] sm:$0xff]
    %v530 = vld [vmem:[#allocation4 + $0x5d8] sm:$0xff]
    %v531 = vld [vmem:[#allocation4 + $0x5e0] sm:$0xff]
    %v532 = vld [vmem:[#allocation4 + $0x5e8] sm:$0xff]
    %v533 = vld [vmem:[#allocation4 + $0x5f0] sm:$0xff]
    %v534 = vld [vmem:[#allocation4 + $0x5f8] sm:$0xff]
    %v535 = vld [vmem:[#allocation4 + $0x600] sm:$0xff]
    %v536 = vld [vmem:[#allocation4 + $0x608] sm:$0xff]
    %v537 = vld [vmem:[#allocation4 + $0x610] sm:$0xff]
    %v538 = vld [vmem:[#allocation4 + $0x618] sm:$0xff]
    %v539 = vld [vmem:[#allocation4 + $0x620] sm:$0xff]
    %v540 = vld [vmem:[#allocation4 + $0x628] sm:$0xff]
    %v541 = vld [vmem:[#allocation4 + $0x630] sm:$0xff]
    %v542 = vld [vmem:[#allocation4 + $0x638] sm:$0xff]
    %v543 = vld [vmem:[#allocation4 + $0x640] sm:$0xff]
    %v544 = vld [vmem:[#allocation4 + $0x648] sm:$0xff]
    %v545 = vld [vmem:[#allocation4 + $0x650] sm:$0xff]
    %v546 = vld [vmem:[#allocation4 + $0x658] sm:$0xff]
    %v547 = vld [vmem:[#allocation4 + $0x660] sm:$0xff]
    %v548 = vld [vmem:[#allocation4 + $0x668] sm:$0xff]
    %v549 = vld [vmem:[#allocation4 + $0x670] sm:$0xff]
    %v550 = vld [vmem:[#allocation4 + $0x678] sm:$0xff]
    %v551 = vld [vmem:[#allocation4 + $0x680] sm:$0xff]
    %v552 = vld [vmem:[#allocation4 + $0x688] sm:$0xff]
    %v553 = vld [vmem:[#allocation4 + $0x690] sm:$0xff]
    %v554 = vld [vmem:[#allocation4 + $0x698] sm:$0xff]
    %v555 = vld [vmem:[#allocation4 + $0x6a0] sm:$0xff]
    %v556 = vld [vmem:[#allocation4 + $0x6a8] sm:$0xff]
    %v557 = vld [vmem:[#allocation4 + $0x6b0] sm:$0xff]
    %v558 = vld [vmem:[#allocation4 + $0x6b8] sm:$0xff]
    %v559 = vld [vmem:[#allocation4 + $0x6c0] sm:$0xff]
    %v560 = vld [vmem:[#allocation4 + $0x6c8] sm:$0xff]
    %v561 = vld [vmem:[#allocation4 + $0x6d0] sm:$0xff]
    %v562 = vld [vmem:[#allocation4 + $0x6d8] sm:$0xff]
    %v563 = vld [vmem:[#allocation4 + $0x6e0] sm:$0xff]
    %v564 = vld [vmem:[#allocation4 + $0x6e8] sm:$0xff]
    %v565 = vld [vmem:[#allocation4 + $0x6f0] sm:$0xff]
    %v566 = vld [vmem:[#allocation4 + $0x6f8] sm:$0xff]
    %v567 = vld [vmem:[#allocation4 + $0x700] sm:$0xff]
    %v568 = vld [vmem:[#allocation4 + $0x708] sm:$0xff]
    %v569 = vld [vmem:[#allocation4 + $0x710] sm:$0xff]
    %v570 = vld [vmem:[#allocation4 + $0x718] sm:$0xff]
    %v571 = vld [vmem:[#allocation4 + $0x720] sm:$0xff]
    %v572 = vld [vmem:[#allocation4 + $0x728] sm:$0xff]
    %v573 = vld [vmem:[#allocation4 + $0x730] sm:$0xff]
    %v574 = vld [vmem:[#allocation4 + $0x738] sm:$0xff]
    %v575 = vld [vmem:[#allocation4 + $0x740] sm:$0xff]
    %v576 = vld [vmem:[#allocation4 + $0x748] sm:$0xff]
    %v577 = vld [vmem:[#allocation4 + $0x750] sm:$0xff]
    %v578 = vld [vmem:[#allocation4 + $0x758] sm:$0xff]
    %v579 = vld [vmem:[#allocation4 + $0x760] sm:$0xff]
    %v580 = vld [vmem:[#allocation4 + $0x768] sm:$0xff]
    %v581 = vld [vmem:[#allocation4 + $0x770] sm:$0xff]
    %v582 = vld [vmem:[#allocation4 + $0x778] sm:$0xff]
    %v583 = vld [vmem:[#allocation4 + $0x780] sm:$0xff]
    %v584 = vld [vmem:[#allocation4 + $0x788] sm:$0xff]
    %v585 = vld [vmem:[#allocation4 + $0x790] sm:$0xff]
    %v586 = vld [vmem:[#allocation4 + $0x798] sm:$0xff]
    %v587 = vld [vmem:[#allocation4 + $0x7a0] sm:$0xff]
    %v588 = vld [vmem:[#allocation4 + $0x7a8] sm:$0xff]
    %v589 = vld [vmem:[#allocation4 + $0x7b0] sm:$0xff]
    %v590 = vld [vmem:[#allocation4 + $0x7b8] sm:$0xff]
    %v591 = vld [vmem:[#allocation4 + $0x7c0] sm:$0xff]
    %v592 = vld [vmem:[#allocation4 + $0x7c8] sm:$0xff]
    %v593 = vld [vmem:[#allocation4 + $0x7d0] sm:$0xff]
    %v594 = vld [vmem:[#allocation4 + $0x7d8] sm:$0xff]
    %v595 = vld [vmem:[#allocation4 + $0x7e0] sm:$0xff]
    %v596 = vld [vmem:[#allocation4 + $0x7e8] sm:$0xff]
    %v597 = vld [vmem:[#allocation4 + $0x7f0] sm:$0xff]
    %v598 = vld [vmem:[#allocation4 + $0x7f8] sm:$0xff]
    %v599 = vld [vmem:[%s4] sm:$0xf]
    %v601 = vlaneseq
    %v602 = vshrl.u32 %v601, 7
    %v603 = vsub.s32 0, %v602
    %v604 = vrot.slane %v599, %v603
    %v605 = vlaneseq
    %v606 = vshrl.u32 %v605, 7
    %v607 = vsub.s32 1, %v606
    %v608 = vrot.slane %v599, %v607
    %v609 = vlaneseq
    %v610 = vshrl.u32 %v609, 7
    %v611 = vsub.s32 2, %v610
    %v612 = vrot.slane %v599, %v611
    %v613 = vlaneseq
    %v614 = vshrl.u32 %v613, 7
    %v615 = vsub.s32 3, %v614
    %v616 = vrot.slane %v599, %v615
    %v877 = vunpack.c.l.b16 %v343
    %v878 = vunpack.c.h.b16 %v343
    %v879 = vunpack.c.l.b16 %v344
    %v880 = vunpack.c.h.b16 %v344
    %v881 = vunpack.c.l.b16 %v345
    %v882 = vunpack.c.h.b16 %v345
    %v883 = vunpack.c.l.b16 %v346
    %v884 = vunpack.c.h.b16 %v346
    %v885 = vunpack.c.l.b16 %v347
    %v886 = vunpack.c.h.b16 %v347
    %v887 = vunpack.c.l.b16 %v348
    %v888 = vunpack.c.h.b16 %v348
    %v889 = vunpack.c.l.b16 %v349
    %v890 = vunpack.c.h.b16 %v349
    %v891 = vunpack.c.l.b16 %v350
    %v892 = vunpack.c.h.b16 %v350
    %v893 = vunpack.c.l.b16 %v351
    %v894 = vunpack.c.h.b16 %v351
    %v895 = vunpack.c.l.b16 %v352
    %v896 = vunpack.c.h.b16 %v352
    %v897 = vunpack.c.l.b16 %v353
    %v898 = vunpack.c.h.b16 %v353
    %v899 = vunpack.c.l.b16 %v354
    %v900 = vunpack.c.h.b16 %v354
    %v901 = vunpack.c.l.b16 %v355
    %v902 = vunpack.c.h.b16 %v355
    %v903 = vunpack.c.l.b16 %v356
    %v904 = vunpack.c.h.b16 %v356
    %v905 = vunpack.c.l.b16 %v357
    %v906 = vunpack.c.h.b16 %v357
    %v907 = vunpack.c.l.b16 %v358
    %v908 = vunpack.c.h.b16 %v358
    %v909 = vunpack.c.l.b16 %v359
    %v910 = vunpack.c.h.b16 %v359
    %v911 = vunpack.c.l.b16 %v360
    %v912 = vunpack.c.h.b16 %v360
    %v913 = vunpack.c.l.b16 %v361
    %v914 = vunpack.c.h.b16 %v361
    %v915 = vunpack.c.l.b16 %v362
    %v916 = vunpack.c.h.b16 %v362
    %v917 = vunpack.c.l.b16 %v363
    %v918 = vunpack.c.h.b16 %v363
    %v919 = vunpack.c.l.b16 %v364
    %v920 = vunpack.c.h.b16 %v364
    %v921 = vunpack.c.l.b16 %v365
    %v922 = vunpack.c.h.b16 %v365
    %v923 = vunpack.c.l.b16 %v366
    %v924 = vunpack.c.h.b16 %v366
    %v925 = vunpack.c.l.b16 %v367
    %v926 = vunpack.c.h.b16 %v367
    %v927 = vunpack.c.l.b16 %v368
    %v928 = vunpack.c.h.b16 %v368
    %v929 = vunpack.c.l.b16 %v369
    %v930 = vunpack.c.h.b16 %v369
    %v931 = vunpack.c.l.b16 %v370
    %v932 = vunpack.c.h.b16 %v370
    %v933 = vunpack.c.l.b16 %v371
    %v934 = vunpack.c.h.b16 %v371
    %v935 = vunpack.c.l.b16 %v372
    %v936 = vunpack.c.h.b16 %v372
    %v937 = vunpack.c.l.b16 %v373
    %v938 = vunpack.c.h.b16 %v373
    %v939 = vunpack.c.l.b16 %v374
    %v940 = vunpack.c.h.b16 %v374
    %v941 = vunpack.c.l.b16 %v375
    %v942 = vunpack.c.h.b16 %v375
    %v943 = vunpack.c.l.b16 %v376
    %v944 = vunpack.c.h.b16 %v376
    %v945 = vunpack.c.l.b16 %v377
    %v946 = vunpack.c.h.b16 %v377
    %v947 = vunpack.c.l.b16 %v378
    %v948 = vunpack.c.h.b16 %v378
    %v949 = vunpack.c.l.b16 %v379
    %v950 = vunpack.c.h.b16 %v379
    %v951 = vunpack.c.l.b16 %v380
    %v952 = vunpack.c.h.b16 %v380
    %v953 = vunpack.c.l.b16 %v381
    %v954 = vunpack.c.h.b16 %v381
    %v955 = vunpack.c.l.b16 %v382
    %v956 = vunpack.c.h.b16 %v382
    %v957 = vunpack.c.l.b16 %v383
    %v958 = vunpack.c.h.b16 %v383
    %v959 = vunpack.c.l.b16 %v384
    %v960 = vunpack.c.h.b16 %v384
    %v961 = vunpack.c.l.b16 %v385
    %v962 = vunpack.c.h.b16 %v385
    %v963 = vunpack.c.l.b16 %v386
    %v964 = vunpack.c.h.b16 %v386
    %v965 = vunpack.c.l.b16 %v387
    %v966 = vunpack.c.h.b16 %v387
    %v967 = vunpack.c.l.b16 %v388
    %v968 = vunpack.c.h.b16 %v388
    %v969 = vunpack.c.l.b16 %v389
    %v970 = vunpack.c.h.b16 %v389
    %v971 = vunpack.c.l.b16 %v390
    %v972 = vunpack.c.h.b16 %v390
    %v973 = vunpack.c.l.b16 %v391
    %v974 = vunpack.c.h.b16 %v391
    %v975 = vunpack.c.l.b16 %v392
    %v976 = vunpack.c.h.b16 %v392
    %v977 = vunpack.c.l.b16 %v393
    %v978 = vunpack.c.h.b16 %v393
    %v979 = vunpack.c.l.b16 %v394
    %v980 = vunpack.c.h.b16 %v394
    %v981 = vunpack.c.l.b16 %v395
    %v982 = vunpack.c.h.b16 %v395
    %v983 = vunpack.c.l.b16 %v396
    %v984 = vunpack.c.h.b16 %v396
    %v985 = vunpack.c.l.b16 %v397
    %v986 = vunpack.c.h.b16 %v397
    %v987 = vunpack.c.l.b16 %v398
    %v988 = vunpack.c.h.b16 %v398
    %v989 = vunpack.c.l.b16 %v399
    %v990 = vunpack.c.h.b16 %v399
    %v991 = vunpack.c.l.b16 %v400
    %v992 = vunpack.c.h.b16 %v400
    %v993 = vunpack.c.l.b16 %v401
    %v994 = vunpack.c.h.b16 %v401
    %v995 = vunpack.c.l.b16 %v402
    %v996 = vunpack.c.h.b16 %v402
    %v997 = vunpack.c.l.b16 %v403
    %v998 = vunpack.c.h.b16 %v403
    %v999 = vunpack.c.l.b16 %v404
    %v1000 = vunpack.c.h.b16 %v404
    %v1001 = vunpack.c.l.b16 %v405
    %v1002 = vunpack.c.h.b16 %v405
    %v1003 = vunpack.c.l.b16 %v406
    %v1004 = vunpack.c.h.b16 %v406
    %v1005 = vunpack.c.l.b16 %v407
    %v1006 = vunpack.c.h.b16 %v407
    %v1007 = vunpack.c.l.b16 %v408
    %v1008 = vunpack.c.h.b16 %v408
    %v1009 = vunpack.c.l.b16 %v409
    %v1010 = vunpack.c.h.b16 %v409
    %v1011 = vunpack.c.l.b16 %v410
    %v1012 = vunpack.c.h.b16 %v410
    %v1013 = vunpack.c.l.b16 %v411
    %v1014 = vunpack.c.h.b16 %v411
    %v1015 = vunpack.c.l.b16 %v412
    %v1016 = vunpack.c.h.b16 %v412
    %v1017 = vunpack.c.l.b16 %v413
    %v1018 = vunpack.c.h.b16 %v413
    %v1019 = vunpack.c.l.b16 %v414
    %v1020 = vunpack.c.h.b16 %v414
    %v1021 = vunpack.c.l.b16 %v415
    %v1022 = vunpack.c.h.b16 %v415
    %v1023 = vunpack.c.l.b16 %v416
    %v1024 = vunpack.c.h.b16 %v416
    %v1025 = vunpack.c.l.b16 %v417
    %v1026 = vunpack.c.h.b16 %v417
    %v1027 = vunpack.c.l.b16 %v418
    %v1028 = vunpack.c.h.b16 %v418
    %v1029 = vunpack.c.l.b16 %v419
    %v1030 = vunpack.c.h.b16 %v419
    %v1031 = vunpack.c.l.b16 %v420
    %v1032 = vunpack.c.h.b16 %v420
    %v1033 = vunpack.c.l.b16 %v421
    %v1034 = vunpack.c.h.b16 %v421
    %v1035 = vunpack.c.l.b16 %v422
    %v1036 = vunpack.c.h.b16 %v422
    %v1037 = vunpack.c.l.b16 %v423
    %v1038 = vunpack.c.h.b16 %v423
    %v1039 = vunpack.c.l.b16 %v424
    %v1040 = vunpack.c.h.b16 %v424
    %v1041 = vunpack.c.l.b16 %v425
    %v1042 = vunpack.c.h.b16 %v425
    %v1043 = vunpack.c.l.b16 %v426
    %v1044 = vunpack.c.h.b16 %v426
    %v1045 = vunpack.c.l.b16 %v427
    %v1046 = vunpack.c.h.b16 %v427
    %v1047 = vunpack.c.l.b16 %v428
    %v1048 = vunpack.c.h.b16 %v428
    %v1049 = vunpack.c.l.b16 %v429
    %v1050 = vunpack.c.h.b16 %v429
    %v1051 = vunpack.c.l.b16 %v430
    %v1052 = vunpack.c.h.b16 %v430
    %v1053 = vunpack.c.l.b16 %v431
    %v1054 = vunpack.c.h.b16 %v431
    %v1055 = vunpack.c.l.b16 %v432
    %v1056 = vunpack.c.h.b16 %v432
    %v1057 = vunpack.c.l.b16 %v433
    %v1058 = vunpack.c.h.b16 %v433
    %v1059 = vunpack.c.l.b16 %v434
    %v1060 = vunpack.c.h.b16 %v434
    %v1061 = vunpack.c.l.b16 %v435
    %v1062 = vunpack.c.h.b16 %v435
    %v1063 = vunpack.c.l.b16 %v436
    %v1064 = vunpack.c.h.b16 %v436
    %v1065 = vunpack.c.l.b16 %v437
    %v1066 = vunpack.c.h.b16 %v437
    %v1067 = vunpack.c.l.b16 %v438
    %v1068 = vunpack.c.h.b16 %v438
    %v1069 = vunpack.c.l.b16 %v439
    %v1070 = vunpack.c.h.b16 %v439
    %v1071 = vunpack.c.l.b16 %v440
    %v1072 = vunpack.c.h.b16 %v440
    %v1073 = vunpack.c.l.b16 %v441
    %v1074 = vunpack.c.h.b16 %v441
    %v1075 = vunpack.c.l.b16 %v442
    %v1076 = vunpack.c.h.b16 %v442
    %v1077 = vunpack.c.l.b16 %v443
    %v1078 = vunpack.c.h.b16 %v443
    %v1079 = vunpack.c.l.b16 %v444
    %v1080 = vunpack.c.h.b16 %v444
    %v1081 = vunpack.c.l.b16 %v445
    %v1082 = vunpack.c.h.b16 %v445
    %v1083 = vunpack.c.l.b16 %v446
    %v1084 = vunpack.c.h.b16 %v446
    %v1085 = vunpack.c.l.b16 %v447
    %v1086 = vunpack.c.h.b16 %v447
    %v1087 = vunpack.c.l.b16 %v448
    %v1088 = vunpack.c.h.b16 %v448
    %v1089 = vunpack.c.l.b16 %v449
    %v1090 = vunpack.c.h.b16 %v449
    %v1091 = vunpack.c.l.b16 %v450
    %v1092 = vunpack.c.h.b16 %v450
    %v1093 = vunpack.c.l.b16 %v451
    %v1094 = vunpack.c.h.b16 %v451
    %v1095 = vunpack.c.l.b16 %v452
    %v1096 = vunpack.c.h.b16 %v452
    %v1097 = vunpack.c.l.b16 %v453
    %v1098 = vunpack.c.h.b16 %v453
    %v1099 = vunpack.c.l.b16 %v454
    %v1100 = vunpack.c.h.b16 %v454
    %v1101 = vunpack.c.l.b16 %v455
    %v1102 = vunpack.c.h.b16 %v455
    %v1103 = vunpack.c.l.b16 %v456
    %v1104 = vunpack.c.h.b16 %v456
    %v1105 = vunpack.c.l.b16 %v457
    %v1106 = vunpack.c.h.b16 %v457
    %v1107 = vunpack.c.l.b16 %v458
    %v1108 = vunpack.c.h.b16 %v458
    %v1109 = vunpack.c.l.b16 %v459
    %v1110 = vunpack.c.h.b16 %v459
    %v1111 = vunpack.c.l.b16 %v460
    %v1112 = vunpack.c.h.b16 %v460
    %v1113 = vunpack.c.l.b16 %v461
    %v1114 = vunpack.c.h.b16 %v461
    %v1115 = vunpack.c.l.b16 %v462
    %v1116 = vunpack.c.h.b16 %v462
    %v1117 = vunpack.c.l.b16 %v463
    %v1118 = vunpack.c.h.b16 %v463
    %v1119 = vunpack.c.l.b16 %v464
    %v1120 = vunpack.c.h.b16 %v464
    %v1121 = vunpack.c.l.b16 %v465
    %v1122 = vunpack.c.h.b16 %v465
    %v1123 = vunpack.c.l.b16 %v466
    %v1124 = vunpack.c.h.b16 %v466
    %v1125 = vunpack.c.l.b16 %v467
    %v1126 = vunpack.c.h.b16 %v467
    %v1127 = vunpack.c.l.b16 %v468
    %v1128 = vunpack.c.h.b16 %v468
    %v1129 = vunpack.c.l.b16 %v469
    %v1130 = vunpack.c.h.b16 %v469
    %v1131 = vunpack.c.l.b16 %v470
    %v1132 = vunpack.c.h.b16 %v470
    %v1133 = vunpack.c.l.b16 %v471
    %v1134 = vunpack.c.h.b16 %v471
    %v1135 = vunpack.c.l.b16 %v472
    %v1136 = vunpack.c.h.b16 %v472
    %v1137 = vunpack.c.l.b16 %v473
    %v1138 = vunpack.c.h.b16 %v473
    %v1139 = vunpack.c.l.b16 %v474
    %v1140 = vunpack.c.h.b16 %v474
    %v1141 = vunpack.c.l.b16 %v475
    %v1142 = vunpack.c.h.b16 %v475
    %v1143 = vunpack.c.l.b16 %v476
    %v1144 = vunpack.c.h.b16 %v476
    %v1145 = vunpack.c.l.b16 %v477
    %v1146 = vunpack.c.h.b16 %v477
    %v1147 = vunpack.c.l.b16 %v478
    %v1148 = vunpack.c.h.b16 %v478
    %v1149 = vunpack.c.l.b16 %v479
    %v1150 = vunpack.c.h.b16 %v479
    %v1151 = vunpack.c.l.b16 %v480
    %v1152 = vunpack.c.h.b16 %v480
    %v1153 = vunpack.c.l.b16 %v481
    %v1154 = vunpack.c.h.b16 %v481
    %v1155 = vunpack.c.l.b16 %v482
    %v1156 = vunpack.c.h.b16 %v482
    %v1157 = vunpack.c.l.b16 %v483
    %v1158 = vunpack.c.h.b16 %v483
    %v1159 = vunpack.c.l.b16 %v484
    %v1160 = vunpack.c.h.b16 %v484
    %v1161 = vunpack.c.l.b16 %v485
    %v1162 = vunpack.c.h.b16 %v485
    %v1163 = vunpack.c.l.b16 %v486
    %v1164 = vunpack.c.h.b16 %v486
    %v1165 = vunpack.c.l.b16 %v487
    %v1166 = vunpack.c.h.b16 %v487
    %v1167 = vunpack.c.l.b16 %v488
    %v1168 = vunpack.c.h.b16 %v488
    %v1169 = vunpack.c.l.b16 %v489
    %v1170 = vunpack.c.h.b16 %v489
    %v1171 = vunpack.c.l.b16 %v490
    %v1172 = vunpack.c.h.b16 %v490
    %v1173 = vunpack.c.l.b16 %v491
    %v1174 = vunpack.c.h.b16 %v491
    %v1175 = vunpack.c.l.b16 %v492
    %v1176 = vunpack.c.h.b16 %v492
    %v1177 = vunpack.c.l.b16 %v493
    %v1178 = vunpack.c.h.b16 %v493
    %v1179 = vunpack.c.l.b16 %v494
    %v1180 = vunpack.c.h.b16 %v494
    %v1181 = vunpack.c.l.b16 %v495
    %v1182 = vunpack.c.h.b16 %v495
    %v1183 = vunpack.c.l.b16 %v496
    %v1184 = vunpack.c.h.b16 %v496
    %v1185 = vunpack.c.l.b16 %v497
    %v1186 = vunpack.c.h.b16 %v497
    %v1187 = vunpack.c.l.b16 %v498
    %v1188 = vunpack.c.h.b16 %v498
    %v1189 = vunpack.c.l.b16 %v499
    %v1190 = vunpack.c.h.b16 %v499
    %v1191 = vunpack.c.l.b16 %v500
    %v1192 = vunpack.c.h.b16 %v500
    %v1193 = vunpack.c.l.b16 %v501
    %v1194 = vunpack.c.h.b16 %v501
    %v1195 = vunpack.c.l.b16 %v502
    %v1196 = vunpack.c.h.b16 %v502
    %v1197 = vunpack.c.l.b16 %v503
    %v1198 = vunpack.c.h.b16 %v503
    %v1199 = vunpack.c.l.b16 %v504
    %v1200 = vunpack.c.h.b16 %v504
    %v1201 = vunpack.c.l.b16 %v505
    %v1202 = vunpack.c.h.b16 %v505
    %v1203 = vunpack.c.l.b16 %v506
    %v1204 = vunpack.c.h.b16 %v506
    %v1205 = vunpack.c.l.b16 %v507
    %v1206 = vunpack.c.h.b16 %v507
    %v1207 = vunpack.c.l.b16 %v508
    %v1208 = vunpack.c.h.b16 %v508
    %v1209 = vunpack.c.l.b16 %v509
    %v1210 = vunpack.c.h.b16 %v509
    %v1211 = vunpack.c.l.b16 %v510
    %v1212 = vunpack.c.h.b16 %v510
    %v1213 = vunpack.c.l.b16 %v511
    %v1214 = vunpack.c.h.b16 %v511
    %v1215 = vunpack.c.l.b16 %v512
    %v1216 = vunpack.c.h.b16 %v512
    %v1217 = vunpack.c.l.b16 %v513
    %v1218 = vunpack.c.h.b16 %v513
    %v1219 = vunpack.c.l.b16 %v514
    %v1220 = vunpack.c.h.b16 %v514
    %v1221 = vunpack.c.l.b16 %v515
    %v1222 = vunpack.c.h.b16 %v515
    %v1223 = vunpack.c.l.b16 %v516
    %v1224 = vunpack.c.h.b16 %v516
    %v1225 = vunpack.c.l.b16 %v517
    %v1226 = vunpack.c.h.b16 %v517
    %v1227 = vunpack.c.l.b16 %v518
    %v1228 = vunpack.c.h.b16 %v518
    %v1229 = vunpack.c.l.b16 %v519
    %v1230 = vunpack.c.h.b16 %v519
    %v1231 = vunpack.c.l.b16 %v520
    %v1232 = vunpack.c.h.b16 %v520
    %v1233 = vunpack.c.l.b16 %v521
    %v1234 = vunpack.c.h.b16 %v521
    %v1235 = vunpack.c.l.b16 %v522
    %v1236 = vunpack.c.h.b16 %v522
    %v1237 = vunpack.c.l.b16 %v523
    %v1238 = vunpack.c.h.b16 %v523
    %v1239 = vunpack.c.l.b16 %v524
    %v1240 = vunpack.c.h.b16 %v524
    %v1241 = vunpack.c.l.b16 %v525
    %v1242 = vunpack.c.h.b16 %v525
    %v1243 = vunpack.c.l.b16 %v526
    %v1244 = vunpack.c.h.b16 %v526
    %v1245 = vunpack.c.l.b16 %v527
    %v1246 = vunpack.c.h.b16 %v527
    %v1247 = vunpack.c.l.b16 %v528
    %v1248 = vunpack.c.h.b16 %v528
    %v1249 = vunpack.c.l.b16 %v529
    %v1250 = vunpack.c.h.b16 %v529
    %v1251 = vunpack.c.l.b16 %v530
    %v1252 = vunpack.c.h.b16 %v530
    %v1253 = vunpack.c.l.b16 %v531
    %v1254 = vunpack.c.h.b16 %v531
    %v1255 = vunpack.c.l.b16 %v532
    %v1256 = vunpack.c.h.b16 %v532
    %v1257 = vunpack.c.l.b16 %v533
    %v1258 = vunpack.c.h.b16 %v533
    %v1259 = vunpack.c.l.b16 %v534
    %v1260 = vunpack.c.h.b16 %v534
    %v1261 = vunpack.c.l.b16 %v535
    %v1262 = vunpack.c.h.b16 %v535
    %v1263 = vunpack.c.l.b16 %v536
    %v1264 = vunpack.c.h.b16 %v536
    %v1265 = vunpack.c.l.b16 %v537
    %v1266 = vunpack.c.h.b16 %v537
    %v1267 = vunpack.c.l.b16 %v538
    %v1268 = vunpack.c.h.b16 %v538
    %v1269 = vunpack.c.l.b16 %v539
    %v1270 = vunpack.c.h.b16 %v539
    %v1271 = vunpack.c.l.b16 %v540
    %v1272 = vunpack.c.h.b16 %v540
    %v1273 = vunpack.c.l.b16 %v541
    %v1274 = vunpack.c.h.b16 %v541
    %v1275 = vunpack.c.l.b16 %v542
    %v1276 = vunpack.c.h.b16 %v542
    %v1277 = vunpack.c.l.b16 %v543
    %v1278 = vunpack.c.h.b16 %v543
    %v1279 = vunpack.c.l.b16 %v544
    %v1280 = vunpack.c.h.b16 %v544
    %v1281 = vunpack.c.l.b16 %v545
    %v1282 = vunpack.c.h.b16 %v545
    %v1283 = vunpack.c.l.b16 %v546
    %v1284 = vunpack.c.h.b16 %v546
    %v1285 = vunpack.c.l.b16 %v547
    %v1286 = vunpack.c.h.b16 %v547
    %v1287 = vunpack.c.l.b16 %v548
    %v1288 = vunpack.c.h.b16 %v548
    %v1289 = vunpack.c.l.b16 %v549
    %v1290 = vunpack.c.h.b16 %v549
    %v1291 = vunpack.c.l.b16 %v550
    %v1292 = vunpack.c.h.b16 %v550
    %v1293 = vunpack.c.l.b16 %v551
    %v1294 = vunpack.c.h.b16 %v551
    %v1295 = vunpack.c.l.b16 %v552
    %v1296 = vunpack.c.h.b16 %v552
    %v1297 = vunpack.c.l.b16 %v553
    %v1298 = vunpack.c.h.b16 %v553
    %v1299 = vunpack.c.l.b16 %v554
    %v1300 = vunpack.c.h.b16 %v554
    %v1301 = vunpack.c.l.b16 %v555
    %v1302 = vunpack.c.h.b16 %v555
    %v1303 = vunpack.c.l.b16 %v556
    %v1304 = vunpack.c.h.b16 %v556
    %v1305 = vunpack.c.l.b16 %v557
    %v1306 = vunpack.c.h.b16 %v557
    %v1307 = vunpack.c.l.b16 %v558
    %v1308 = vunpack.c.h.b16 %v558
    %v1309 = vunpack.c.l.b16 %v559
    %v1310 = vunpack.c.h.b16 %v559
    %v1311 = vunpack.c.l.b16 %v560
    %v1312 = vunpack.c.h.b16 %v560
    %v1313 = vunpack.c.l.b16 %v561
    %v1314 = vunpack.c.h.b16 %v561
    %v1315 = vunpack.c.l.b16 %v562
    %v1316 = vunpack.c.h.b16 %v562
    %v1317 = vunpack.c.l.b16 %v563
    %v1318 = vunpack.c.h.b16 %v563
    %v1319 = vunpack.c.l.b16 %v564
    %v1320 = vunpack.c.h.b16 %v564
    %v1321 = vunpack.c.l.b16 %v565
    %v1322 = vunpack.c.h.b16 %v565
    %v1323 = vunpack.c.l.b16 %v566
    %v1324 = vunpack.c.h.b16 %v566
    %v1325 = vunpack.c.l.b16 %v567
    %v1326 = vunpack.c.h.b16 %v567
    %v1327 = vunpack.c.l.b16 %v568
    %v1328 = vunpack.c.h.b16 %v568
    %v1329 = vunpack.c.l.b16 %v569
    %v1330 = vunpack.c.h.b16 %v569
    %v1331 = vunpack.c.l.b16 %v570
    %v1332 = vunpack.c.h.b16 %v570
    %v1333 = vunpack.c.l.b16 %v571
    %v1334 = vunpack.c.h.b16 %v571
    %v1335 = vunpack.c.l.b16 %v572
    %v1336 = vunpack.c.h.b16 %v572
    %v1337 = vunpack.c.l.b16 %v573
    %v1338 = vunpack.c.h.b16 %v573
    %v1339 = vunpack.c.l.b16 %v574
    %v1340 = vunpack.c.h.b16 %v574
    %v1341 = vunpack.c.l.b16 %v575
    %v1342 = vunpack.c.h.b16 %v575
    %v1343 = vunpack.c.l.b16 %v576
    %v1344 = vunpack.c.h.b16 %v576
    %v1345 = vunpack.c.l.b16 %v577
    %v1346 = vunpack.c.h.b16 %v577
    %v1347 = vunpack.c.l.b16 %v578
    %v1348 = vunpack.c.h.b16 %v578
    %v1349 = vunpack.c.l.b16 %v579
    %v1350 = vunpack.c.h.b16 %v579
    %v1351 = vunpack.c.l.b16 %v580
    %v1352 = vunpack.c.h.b16 %v580
    %v1353 = vunpack.c.l.b16 %v581
    %v1354 = vunpack.c.h.b16 %v581
    %v1355 = vunpack.c.l.b16 %v582
    %v1356 = vunpack.c.h.b16 %v582
    %v1357 = vunpack.c.l.b16 %v583
    %v1358 = vunpack.c.h.b16 %v583
    %v1359 = vunpack.c.l.b16 %v584
    %v1360 = vunpack.c.h.b16 %v584
    %v1361 = vunpack.c.l.b16 %v585
    %v1362 = vunpack.c.h.b16 %v585
    %v1363 = vunpack.c.l.b16 %v586
    %v1364 = vunpack.c.h.b16 %v586
    %v1365 = vunpack.c.l.b16 %v587
    %v1366 = vunpack.c.h.b16 %v587
    %v1367 = vunpack.c.l.b16 %v588
    %v1368 = vunpack.c.h.b16 %v588
    %v1369 = vunpack.c.l.b16 %v589
    %v1370 = vunpack.c.h.b16 %v589
    %v1371 = vunpack.c.l.b16 %v590
    %v1372 = vunpack.c.h.b16 %v590
    %v1373 = vunpack.c.l.b16 %v591
    %v1374 = vunpack.c.h.b16 %v591
    %v1375 = vunpack.c.l.b16 %v592
    %v1376 = vunpack.c.h.b16 %v592
    %v1377 = vunpack.c.l.b16 %v593
    %v1378 = vunpack.c.h.b16 %v593
    %v1379 = vunpack.c.l.b16 %v594
    %v1380 = vunpack.c.h.b16 %v594
    %v1381 = vunpack.c.l.b16 %v595
    %v1382 = vunpack.c.h.b16 %v595
    %v1383 = vunpack.c.l.b16 %v596
    %v1384 = vunpack.c.h.b16 %v596
    %v1385 = vunpack.c.l.b16 %v597
    %v1386 = vunpack.c.h.b16 %v597
    %v1387 = vunpack.c.l.b16 %v598
    %v1388 = vunpack.c.h.b16 %v598
    %v1389 = vpack.c.b16 %v881, %v877
    %v1390 = vpack.c.b16 %v882, %v878
    %v1391 = vpack.c.b16 %v883, %v879
    %v1392 = vpack.c.b16 %v884, %v880
    %v1393 = vpack.c.b16 %v889, %v885
    %v1394 = vpack.c.b16 %v890, %v886
    %v1395 = vpack.c.b16 %v891, %v887
    %v1396 = vpack.c.b16 %v892, %v888
    %v1397 = vpack.c.b16 %v897, %v893
    %v1398 = vpack.c.b16 %v898, %v894
    %v1399 = vpack.c.b16 %v899, %v895
    %v1400 = vpack.c.b16 %v900, %v896
    %v1401 = vpack.c.b16 %v905, %v901
    %v1402 = vpack.c.b16 %v906, %v902
    %v1403 = vpack.c.b16 %v907, %v903
    %v1404 = vpack.c.b16 %v908, %v904
    %v1405 = vpack.c.b16 %v913, %v909
    %v1406 = vpack.c.b16 %v914, %v910
    %v1407 = vpack.c.b16 %v915, %v911
    %v1408 = vpack.c.b16 %v916, %v912
    %v1409 = vpack.c.b16 %v921, %v917
    %v1410 = vpack.c.b16 %v922, %v918
    %v1411 = vpack.c.b16 %v923, %v919
    %v1412 = vpack.c.b16 %v924, %v920
    %v1413 = vpack.c.b16 %v929, %v925
    %v1414 = vpack.c.b16 %v930, %v926
    %v1415 = vpack.c.b16 %v931, %v927
    %v1416 = vpack.c.b16 %v932, %v928
    %v1417 = vpack.c.b16 %v937, %v933
    %v1418 = vpack.c.b16 %v938, %v934
    %v1419 = vpack.c.b16 %v939, %v935
    %v1420 = vpack.c.b16 %v940, %v936
    %v1421 = vpack.c.b16 %v945, %v941
    %v1422 = vpack.c.b16 %v946, %v942
    %v1423 = vpack.c.b16 %v947, %v943
    %v1424 = vpack.c.b16 %v948, %v944
    %v1425 = vpack.c.b16 %v953, %v949
    %v1426 = vpack.c.b16 %v954, %v950
    %v1427 = vpack.c.b16 %v955, %v951
    %v1428 = vpack.c.b16 %v956, %v952
    %v1429 = vpack.c.b16 %v961, %v957
    %v1430 = vpack.c.b16 %v962, %v958
    %v1431 = vpack.c.b16 %v963, %v959
    %v1432 = vpack.c.b16 %v964, %v960
    %v1433 = vpack.c.b16 %v969, %v965
    %v1434 = vpack.c.b16 %v970, %v966
    %v1435 = vpack.c.b16 %v971, %v967
    %v1436 = vpack.c.b16 %v972, %v968
    %v1437 = vpack.c.b16 %v977, %v973
    %v1438 = vpack.c.b16 %v978, %v974
    %v1439 = vpack.c.b16 %v979, %v975
    %v1440 = vpack.c.b16 %v980, %v976
    %v1441 = vpack.c.b16 %v985, %v981
    %v1442 = vpack.c.b16 %v986, %v982
    %v1443 = vpack.c.b16 %v987, %v983
    %v1444 = vpack.c.b16 %v988, %v984
    %v1445 = vpack.c.b16 %v993, %v989
    %v1446 = vpack.c.b16 %v994, %v990
    %v1447 = vpack.c.b16 %v995, %v991
    %v1448 = vpack.c.b16 %v996, %v992
    %v1449 = vpack.c.b16 %v1001, %v997
    %v1450 = vpack.c.b16 %v1002, %v998
    %v1451 = vpack.c.b16 %v1003, %v999
    %v1452 = vpack.c.b16 %v1004, %v1000
    %v1453 = vpack.c.b16 %v1009, %v1005
    %v1454 = vpack.c.b16 %v1010, %v1006
    %v1455 = vpack.c.b16 %v1011, %v1007
    %v1456 = vpack.c.b16 %v1012, %v1008
    %v1457 = vpack.c.b16 %v1017, %v1013
    %v1458 = vpack.c.b16 %v1018, %v1014
    %v1459 = vpack.c.b16 %v1019, %v1015
    %v1460 = vpack.c.b16 %v1020, %v1016
    %v1461 = vpack.c.b16 %v1025, %v1021
    %v1462 = vpack.c.b16 %v1026, %v1022
    %v1463 = vpack.c.b16 %v1027, %v1023
    %v1464 = vpack.c.b16 %v1028, %v1024
    %v1465 = vpack.c.b16 %v1033, %v1029
    %v1466 = vpack.c.b16 %v1034, %v1030
    %v1467 = vpack.c.b16 %v1035, %v1031
    %v1468 = vpack.c.b16 %v1036, %v1032
    %v1469 = vpack.c.b16 %v1041, %v1037
    %v1470 = vpack.c.b16 %v1042, %v1038
    %v1471 = vpack.c.b16 %v1043, %v1039
    %v1472 = vpack.c.b16 %v1044, %v1040
    %v1473 = vpack.c.b16 %v1049, %v1045
    %v1474 = vpack.c.b16 %v1050, %v1046
    %v1475 = vpack.c.b16 %v1051, %v1047
    %v1476 = vpack.c.b16 %v1052, %v1048
    %v1477 = vpack.c.b16 %v1057, %v1053
    %v1478 = vpack.c.b16 %v1058, %v1054
    %v1479 = vpack.c.b16 %v1059, %v1055
    %v1480 = vpack.c.b16 %v1060, %v1056
    %v1481 = vpack.c.b16 %v1065, %v1061
    %v1482 = vpack.c.b16 %v1066, %v1062
    %v1483 = vpack.c.b16 %v1067, %v1063
    %v1484 = vpack.c.b16 %v1068, %v1064
    %v1485 = vpack.c.b16 %v1073, %v1069
    %v1486 = vpack.c.b16 %v1074, %v1070
    %v1487 = vpack.c.b16 %v1075, %v1071
    %v1488 = vpack.c.b16 %v1076, %v1072
    %v1489 = vpack.c.b16 %v1081, %v1077
    %v1490 = vpack.c.b16 %v1082, %v1078
    %v1491 = vpack.c.b16 %v1083, %v1079
    %v1492 = vpack.c.b16 %v1084, %v1080
    %v1493 = vpack.c.b16 %v1089, %v1085
    %v1494 = vpack.c.b16 %v1090, %v1086
    %v1495 = vpack.c.b16 %v1091, %v1087
    %v1496 = vpack.c.b16 %v1092, %v1088
    %v1497 = vpack.c.b16 %v1097, %v1093
    %v1498 = vpack.c.b16 %v1098, %v1094
    %v1499 = vpack.c.b16 %v1099, %v1095
    %v1500 = vpack.c.b16 %v1100, %v1096
    %v1501 = vpack.c.b16 %v1105, %v1101
    %v1502 = vpack.c.b16 %v1106, %v1102
    %v1503 = vpack.c.b16 %v1107, %v1103
    %v1504 = vpack.c.b16 %v1108, %v1104
    %v1505 = vpack.c.b16 %v1113, %v1109
    %v1506 = vpack.c.b16 %v1114, %v1110
    %v1507 = vpack.c.b16 %v1115, %v1111
    %v1508 = vpack.c.b16 %v1116, %v1112
    %v1509 = vpack.c.b16 %v1121, %v1117
    %v1510 = vpack.c.b16 %v1122, %v1118
    %v1511 = vpack.c.b16 %v1123, %v1119
    %v1512 = vpack.c.b16 %v1124, %v1120
    %v1513 = vpack.c.b16 %v1129, %v1125
    %v1514 = vpack.c.b16 %v1130, %v1126
    %v1515 = vpack.c.b16 %v1131, %v1127
    %v1516 = vpack.c.b16 %v1132, %v1128
    %v1517 = vpack.c.b16 %v1137, %v1133
    %v1518 = vpack.c.b16 %v1138, %v1134
    %v1519 = vpack.c.b16 %v1139, %v1135
    %v1520 = vpack.c.b16 %v1140, %v1136
    %v1521 = vpack.c.b16 %v1145, %v1141
    %v1522 = vpack.c.b16 %v1146, %v1142
    %v1523 = vpack.c.b16 %v1147, %v1143
    %v1524 = vpack.c.b16 %v1148, %v1144
    %v1525 = vpack.c.b16 %v1153, %v1149
    %v1526 = vpack.c.b16 %v1154, %v1150
    %v1527 = vpack.c.b16 %v1155, %v1151
    %v1528 = vpack.c.b16 %v1156, %v1152
    %v1529 = vpack.c.b16 %v1161, %v1157
    %v1530 = vpack.c.b16 %v1162, %v1158
    %v1531 = vpack.c.b16 %v1163, %v1159
    %v1532 = vpack.c.b16 %v1164, %v1160
    %v1533 = vpack.c.b16 %v1169, %v1165
    %v1534 = vpack.c.b16 %v1170, %v1166
    %v1535 = vpack.c.b16 %v1171, %v1167
    %v1536 = vpack.c.b16 %v1172, %v1168
    %v1537 = vpack.c.b16 %v1177, %v1173
    %v1538 = vpack.c.b16 %v1178, %v1174
    %v1539 = vpack.c.b16 %v1179, %v1175
    %v1540 = vpack.c.b16 %v1180, %v1176
    %v1541 = vpack.c.b16 %v1185, %v1181
    %v1542 = vpack.c.b16 %v1186, %v1182
    %v1543 = vpack.c.b16 %v1187, %v1183
    %v1544 = vpack.c.b16 %v1188, %v1184
    %v1545 = vpack.c.b16 %v1193, %v1189
    %v1546 = vpack.c.b16 %v1194, %v1190
    %v1547 = vpack.c.b16 %v1195, %v1191
    %v1548 = vpack.c.b16 %v1196, %v1192
    %v1549 = vpack.c.b16 %v1201, %v1197
    %v1550 = vpack.c.b16 %v1202, %v1198
    %v1551 = vpack.c.b16 %v1203, %v1199
    %v1552 = vpack.c.b16 %v1204, %v1200
    %v1553 = vpack.c.b16 %v1209, %v1205
    %v1554 = vpack.c.b16 %v1210, %v1206
    %v1555 = vpack.c.b16 %v1211, %v1207
    %v1556 = vpack.c.b16 %v1212, %v1208
    %v1557 = vpack.c.b16 %v1217, %v1213
    %v1558 = vpack.c.b16 %v1218, %v1214
    %v1559 = vpack.c.b16 %v1219, %v1215
    %v1560 = vpack.c.b16 %v1220, %v1216
    %v1561 = vpack.c.b16 %v1225, %v1221
    %v1562 = vpack.c.b16 %v1226, %v1222
    %v1563 = vpack.c.b16 %v1227, %v1223
    %v1564 = vpack.c.b16 %v1228, %v1224
    %v1565 = vpack.c.b16 %v1233, %v1229
    %v1566 = vpack.c.b16 %v1234, %v1230
    %v1567 = vpack.c.b16 %v1235, %v1231
    %v1568 = vpack.c.b16 %v1236, %v1232
    %v1569 = vpack.c.b16 %v1241, %v1237
    %v1570 = vpack.c.b16 %v1242, %v1238
    %v1571 = vpack.c.b16 %v1243, %v1239
    %v1572 = vpack.c.b16 %v1244, %v1240
    %v1573 = vpack.c.b16 %v1249, %v1245
    %v1574 = vpack.c.b16 %v1250, %v1246
    %v1575 = vpack.c.b16 %v1251, %v1247
    %v1576 = vpack.c.b16 %v1252, %v1248
    %v1577 = vpack.c.b16 %v1257, %v1253
    %v1578 = vpack.c.b16 %v1258, %v1254
    %v1579 = vpack.c.b16 %v1259, %v1255
    %v1580 = vpack.c.b16 %v1260, %v1256
    %v1581 = vpack.c.b16 %v1265, %v1261
    %v1582 = vpack.c.b16 %v1266, %v1262
    %v1583 = vpack.c.b16 %v1267, %v1263
    %v1584 = vpack.c.b16 %v1268, %v1264
    %v1585 = vpack.c.b16 %v1273, %v1269
    %v1586 = vpack.c.b16 %v1274, %v1270
    %v1587 = vpack.c.b16 %v1275, %v1271
    %v1588 = vpack.c.b16 %v1276, %v1272
    %v1589 = vpack.c.b16 %v1281, %v1277
    %v1590 = vpack.c.b16 %v1282, %v1278
    %v1591 = vpack.c.b16 %v1283, %v1279
    %v1592 = vpack.c.b16 %v1284, %v1280
    %v1593 = vpack.c.b16 %v1289, %v1285
    %v1594 = vpack.c.b16 %v1290, %v1286
    %v1595 = vpack.c.b16 %v1291, %v1287
    %v1596 = vpack.c.b16 %v1292, %v1288
    %v1597 = vpack.c.b16 %v1297, %v1293
    %v1598 = vpack.c.b16 %v1298, %v1294
    %v1599 = vpack.c.b16 %v1299, %v1295
    %v1600 = vpack.c.b16 %v1300, %v1296
    %v1601 = vpack.c.b16 %v1305, %v1301
    %v1602 = vpack.c.b16 %v1306, %v1302
    %v1603 = vpack.c.b16 %v1307, %v1303
    %v1604 = vpack.c.b16 %v1308, %v1304
    %v1605 = vpack.c.b16 %v1313, %v1309
    %v1606 = vpack.c.b16 %v1314, %v1310
    %v1607 = vpack.c.b16 %v1315, %v1311
    %v1608 = vpack.c.b16 %v1316, %v1312
    %v1609 = vpack.c.b16 %v1321, %v1317
    %v1610 = vpack.c.b16 %v1322, %v1318
    %v1611 = vpack.c.b16 %v1323, %v1319
    %v1612 = vpack.c.b16 %v1324, %v1320
    %v1613 = vpack.c.b16 %v1329, %v1325
    %v1614 = vpack.c.b16 %v1330, %v1326
    %v1615 = vpack.c.b16 %v1331, %v1327
    %v1616 = vpack.c.b16 %v1332, %v1328
    %v1617 = vpack.c.b16 %v1337, %v1333
    %v1618 = vpack.c.b16 %v1338, %v1334
    %v1619 = vpack.c.b16 %v1339, %v1335
    %v1620 = vpack.c.b16 %v1340, %v1336
    %v1621 = vpack.c.b16 %v1345, %v1341
    %v1622 = vpack.c.b16 %v1346, %v1342
    %v1623 = vpack.c.b16 %v1347, %v1343
    %v1624 = vpack.c.b16 %v1348, %v1344
    %v1625 = vpack.c.b16 %v1353, %v1349
    %v1626 = vpack.c.b16 %v1354, %v1350
    %v1627 = vpack.c.b16 %v1355, %v1351
    %v1628 = vpack.c.b16 %v1356, %v1352
    %v1629 = vpack.c.b16 %v1361, %v1357
    %v1630 = vpack.c.b16 %v1362, %v1358
    %v1631 = vpack.c.b16 %v1363, %v1359
    %v1632 = vpack.c.b16 %v1364, %v1360
    %v1633 = vpack.c.b16 %v1369, %v1365
    %v1634 = vpack.c.b16 %v1370, %v1366
    %v1635 = vpack.c.b16 %v1371, %v1367
    %v1636 = vpack.c.b16 %v1372, %v1368
    %v1637 = vpack.c.b16 %v1377, %v1373
    %v1638 = vpack.c.b16 %v1378, %v1374
    %v1639 = vpack.c.b16 %v1379, %v1375
    %v1640 = vpack.c.b16 %v1380, %v1376
    %v1641 = vpack.c.b16 %v1385, %v1381
    %v1642 = vpack.c.b16 %v1386, %v1382
    %v1643 = vpack.c.b16 %v1387, %v1383
    %v1644 = vpack.c.b16 %v1388, %v1384
    %1901 = vmatprep.subr.bf16.mxu0 %v1390
    %1902 = vmatpush1.bf16.msra.mxu0 %v1389
    %1903 = vmatprep.subr.bf16.mxu0 %v1394
    %1904 = vmatpush1.bf16.msra.mxu0 %v1393
    %1905 = vmatprep.subr.bf16.mxu0 %v1398
    %1906 = vmatpush1.bf16.msra.mxu0 %v1397
    %1907 = vmatprep.subr.bf16.mxu0 %v1402
    %1908 = vmatpush1.bf16.msra.mxu0 %v1401
    %1909 = vmatprep.subr.bf16.mxu0 %v1406
    %1910 = vmatpush1.bf16.msra.mxu0 %v1405
    %1911 = vmatprep.subr.bf16.mxu0 %v1410
    %1912 = vmatpush1.bf16.msra.mxu0 %v1409
    %1913 = vmatprep.subr.bf16.mxu0 %v1414
    %1914 = vmatpush1.bf16.msra.mxu0 %v1413
    %1915 = vmatprep.subr.bf16.mxu0 %v1418
    %1916 = vmatpush1.bf16.msra.mxu0 %v1417
    %1917 = vmatprep.subr.bf16.mxu0 %v1422
    %1918 = vmatpush1.bf16.msra.mxu0 %v1421
    %1919 = vmatprep.subr.bf16.mxu0 %v1426
    %1920 = vmatpush1.bf16.msra.mxu0 %v1425
    %1921 = vmatprep.subr.bf16.mxu0 %v1430
    %1922 = vmatpush1.bf16.msra.mxu0 %v1429
    %1923 = vmatprep.subr.bf16.mxu0 %v1434
    %1924 = vmatpush1.bf16.msra.mxu0 %v1433
    %1925 = vmatprep.subr.bf16.mxu0 %v1438
    %1926 = vmatpush1.bf16.msra.mxu0 %v1437
    %1927 = vmatprep.subr.bf16.mxu0 %v1442
    %1928 = vmatpush1.bf16.msra.mxu0 %v1441
    %1929 = vmatprep.subr.bf16.mxu0 %v1446
    %1930 = vmatpush1.bf16.msra.mxu0 %v1445
    %1931 = vmatprep.subr.bf16.mxu0 %v1450
    %1932 = vmatpush1.bf16.msra.mxu0 %v1449
    %1933 = vmatprep.mubr.bf16.mxu0 %v336
    %1934 = vmatmul.mubr.bf16.gmra.mrb[0].mxu0 %v335
    %v1935 = vpop.f32.mrb[0].mxu0
    %v1936 = vadd.f32 %v604, %v1935
    %v1937 = vpop.f32.mrb[0].mxu0
    %v1938 = vadd.f32 %v608, %v1937
    %v1939 = vpop.f32.mrb[0].mxu0
    %v1940 = vpop.f32.mrb[0].mxu0
    %1941 = vdwg.mxu0
    %1942 = vmatprep.subr.bf16.mxu0 %v1454
    %1943 = vmatpush1.bf16.msra.mxu0 %v1453
    %1944 = vmatprep.subr.bf16.mxu0 %v1458
    %1945 = vmatpush1.bf16.msra.mxu0 %v1457
    %1946 = vmatprep.subr.bf16.mxu0 %v1462
    %1947 = vmatpush1.bf16.msra.mxu0 %v1461
    %1948 = vmatprep.subr.bf16.mxu0 %v1466
    %1949 = vmatpush1.bf16.msra.mxu0 %v1465
    %1950 = vmatprep.subr.bf16.mxu0 %v1470
    %1951 = vmatpush1.bf16.msra.mxu0 %v1469
    %1952 = vmatprep.subr.bf16.mxu0 %v1474
    %1953 = vmatpush1.bf16.msra.mxu0 %v1473
    %1954 = vmatprep.subr.bf16.mxu0 %v1478
    %1955 = vmatpush1.bf16.msra.mxu0 %v1477
    %1956 = vmatprep.subr.bf16.mxu0 %v1482
    %1957 = vmatpush1.bf16.msra.mxu0 %v1481
    %1958 = vmatprep.subr.bf16.mxu0 %v1486
    %1959 = vmatpush1.bf16.msra.mxu0 %v1485
    %1960 = vmatprep.subr.bf16.mxu0 %v1490
    %1961 = vmatpush1.bf16.msra.mxu0 %v1489
    %1962 = vmatprep.subr.bf16.mxu0 %v1494
    %1963 = vmatpush1.bf16.msra.mxu0 %v1493
    %1964 = vmatprep.subr.bf16.mxu0 %v1498
    %1965 = vmatpush1.bf16.msra.mxu0 %v1497
    %1966 = vmatprep.subr.bf16.mxu0 %v1502
    %1967 = vmatpush1.bf16.msra.mxu0 %v1501
    %1968 = vmatprep.subr.bf16.mxu0 %v1506
    %1969 = vmatpush1.bf16.msra.mxu0 %v1505
    %1970 = vmatprep.subr.bf16.mxu0 %v1510
    %1971 = vmatpush1.bf16.msra.mxu0 %v1509
    %1972 = vmatprep.subr.bf16.mxu0 %v1514
    %1973 = vmatpush1.bf16.msra.mxu0 %v1513
    %1974 = vmatprep.mubr.bf16.mxu0 %v338
    %1975 = vmatmul.mubr.bf16.gmra.mrb[0].mxu0 %v337
    %v1976 = vpop.f32.mrb[0].mxu0
    %v1977 = vadd.f32 %v1936, %v1976
    %v1978 = vpop.f32.mrb[0].mxu0
    %v1979 = vadd.f32 %v1938, %v1978
    %v1980 = vpop.f32.mrb[0].mxu0
    %v1981 = vpop.f32.mrb[0].mxu0
    %1982 = vdwg.mxu0
    %1983 = vmatprep.subr.bf16.mxu0 %v1518
    %1984 = vmatpush1.bf16.msra.mxu0 %v1517
    %1985 = vmatprep.subr.bf16.mxu0 %v1522
    %1986 = vmatpush1.bf16.msra.mxu0 %v1521
    %1987 = vmatprep.subr.bf16.mxu0 %v1526
    %1988 = vmatpush1.bf16.msra.mxu0 %v1525
    %1989 = vmatprep.subr.bf16.mxu0 %v1530
    %1990 = vmatpush1.bf16.msra.mxu0 %v1529
    %1991 = vmatprep.subr.bf16.mxu0 %v1534
    %1992 = vmatpush1.bf16.msra.mxu0 %v1533
    %1993 = vmatprep.subr.bf16.mxu0 %v1538
    %1994 = vmatpush1.bf16.msra.mxu0 %v1537
    %1995 = vmatprep.subr.bf16.mxu0 %v1542
    %1996 = vmatpush1.bf16.msra.mxu0 %v1541
    %1997 = vmatprep.subr.bf16.mxu0 %v1546
    %1998 = vmatpush1.bf16.msra.mxu0 %v1545
    %1999 = vmatprep.subr.bf16.mxu0 %v1550
    %2000 = vmatpush1.bf16.msra.mxu0 %v1549
    %2001 = vmatprep.subr.bf16.mxu0 %v1554
    %2002 = vmatpush1.bf16.msra.mxu0 %v1553
    %2003 = vmatprep.subr.bf16.mxu0 %v1558
    %2004 = vmatpush1.bf16.msra.mxu0 %v1557
    %2005 = vmatprep.subr.bf16.mxu0 %v1562
    %2006 = vmatpush1.bf16.msra.mxu0 %v1561
    %2007 = vmatprep.subr.bf16.mxu0 %v1566
    %2008 = vmatpush1.bf16.msra.mxu0 %v1565
    %2009 = vmatprep.subr.bf16.mxu0 %v1570
    %2010 = vmatpush1.bf16.msra.mxu0 %v1569
    %2011 = vmatprep.subr.bf16.mxu0 %v1574
    %2012 = vmatpush1.bf16.msra.mxu0 %v1573
    %2013 = vmatprep.subr.bf16.mxu0 %v1578
    %2014 = vmatpush1.bf16.msra.mxu0 %v1577
    %2015 = vmatprep.mubr.bf16.mxu0 %v340
    %2016 = vmatmul.mubr.bf16.gmra.mrb[0].mxu0 %v339
    %v2017 = vpop.f32.mrb[0].mxu0
    %v2018 = vadd.f32 %v1977, %v2017
    %v2019 = vpop.f32.mrb[0].mxu0
    %v2020 = vadd.f32 %v1979, %v2019
    %v2021 = vpop.f32.mrb[0].mxu0
    %v2022 = vpop.f32.mrb[0].mxu0
    %2023 = vdwg.mxu0
    %2024 = vmatprep.subr.bf16.mxu0 %v1582
    %2025 = vmatpush1.bf16.msra.mxu0 %v1581
    %2026 = vmatprep.subr.bf16.mxu0 %v1586
    %2027 = vmatpush1.bf16.msra.mxu0 %v1585
    %2028 = vmatprep.subr.bf16.mxu0 %v1590
    %2029 = vmatpush1.bf16.msra.mxu0 %v1589
    %2030 = vmatprep.subr.bf16.mxu0 %v1594
    %2031 = vmatpush1.bf16.msra.mxu0 %v1593
    %2032 = vmatprep.subr.bf16.mxu0 %v1598
    %2033 = vmatpush1.bf16.msra.mxu0 %v1597
    %2034 = vmatprep.subr.bf16.mxu0 %v1602
    %2035 = vmatpush1.bf16.msra.mxu0 %v1601
    %2036 = vmatprep.subr.bf16.mxu0 %v1606
    %2037 = vmatpush1.bf16.msra.mxu0 %v1605
    %2038 = vmatprep.subr.bf16.mxu0 %v1610
    %2039 = vmatpush1.bf16.msra.mxu0 %v1609
    %2040 = vmatprep.subr.bf16.mxu0 %v1614
    %2041 = vmatpush1.bf16.msra.mxu0 %v1613
    %2042 = vmatprep.subr.bf16.mxu0 %v1618
    %2043 = vmatpush1.bf16.msra.mxu0 %v1617
    %2044 = vmatprep.subr.bf16.mxu0 %v1622
    %2045 = vmatpush1.bf16.msra.mxu0 %v1621
    %2046 = vmatprep.subr.bf16.mxu0 %v1626
    %2047 = vmatpush1.bf16.msra.mxu0 %v1625
    %2048 = vmatprep.subr.bf16.mxu0 %v1630
    %2049 = vmatpush1.bf16.msra.mxu0 %v1629
    %2050 = vmatprep.subr.bf16.mxu0 %v1634
    %2051 = vmatpush1.bf16.msra.mxu0 %v1633
    %2052 = vmatprep.subr.bf16.mxu0 %v1638
    %2053 = vmatpush1.bf16.msra.mxu0 %v1637
    %2054 = vmatprep.subr.bf16.mxu0 %v1642
    %2055 = vmatpush1.bf16.msra.mxu0 %v1641
    %2056 = vmatprep.mubr.bf16.mxu0 %v342
    %2057 = vmatmul.mubr.bf16.gmra.mrb[0].mxu0 %v341
    %v2058 = vpop.f32.mrb[0].mxu0
    %v2059 = vadd.f32 %v2018, %v2058
    %v2060 = vpop.f32.mrb[0].mxu0
    %v2061 = vadd.f32 %v2020, %v2060
    %v2062 = vpop.f32.mrb[0].mxu0
    %v2063 = vpop.f32.mrb[0].mxu0
    %2064 = vdwg.mxu0
    %2065 = vmatprep.subr.bf16.mxu0 %v1392
    %2066 = vmatpush1.bf16.msra.mxu0 %v1391
    %2067 = vmatprep.subr.bf16.mxu0 %v1396
    %2068 = vmatpush1.bf16.msra.mxu0 %v1395
    %2069 = vmatprep.subr.bf16.mxu0 %v1400
    %2070 = vmatpush1.bf16.msra.mxu0 %v1399
    %2071 = vmatprep.subr.bf16.mxu0 %v1404
    %2072 = vmatpush1.bf16.msra.mxu0 %v1403
    %2073 = vmatprep.subr.bf16.mxu0 %v1408
    %2074 = vmatpush1.bf16.msra.mxu0 %v1407
    %2075 = vmatprep.subr.bf16.mxu0 %v1412
    %2076 = vmatpush1.bf16.msra.mxu0 %v1411
    %2077 = vmatprep.subr.bf16.mxu0 %v1416
    %2078 = vmatpush1.bf16.msra.mxu0 %v1415
    %2079 = vmatprep.subr.bf16.mxu0 %v1420
    %2080 = vmatpush1.bf16.msra.mxu0 %v1419
    %2081 = vmatprep.subr.bf16.mxu0 %v1424
    %2082 = vmatpush1.bf16.msra.mxu0 %v1423
    %2083 = vmatprep.subr.bf16.mxu0 %v1428
    %2084 = vmatpush1.bf16.msra.mxu0 %v1427
    %2085 = vmatprep.subr.bf16.mxu0 %v1432
    %2086 = vmatpush1.bf16.msra.mxu0 %v1431
    %2087 = vmatprep.subr.bf16.mxu0 %v1436
    %2088 = vmatpush1.bf16.msra.mxu0 %v1435
    %2089 = vmatprep.subr.bf16.mxu0 %v1440
    %2090 = vmatpush1.bf16.msra.mxu0 %v1439
    %2091 = vmatprep.subr.bf16.mxu0 %v1444
    %2092 = vmatpush1.bf16.msra.mxu0 %v1443
    %2093 = vmatprep.subr.bf16.mxu0 %v1448
    %2094 = vmatpush1.bf16.msra.mxu0 %v1447
    %2095 = vmatprep.subr.bf16.mxu0 %v1452
    %2096 = vmatpush1.bf16.msra.mxu0 %v1451
    %2097 = vmatprep.mubr.bf16.mxu0 %v336
    %2098 = vmatmul.mubr.bf16.gmra.mrb[0].mxu0 %v335
    %v2099 = vpop.f32.mrb[0].mxu0
    %v2100 = vadd.f32 %v612, %v2099
    %v2101 = vpop.f32.mrb[0].mxu0
    %v2102 = vadd.f32 %v616, %v2101
    %v2103 = vpop.f32.mrb[0].mxu0
    %v2104 = vpop.f32.mrb[0].mxu0
    %2105 = vdwg.mxu0
    %2106 = vmatprep.subr.bf16.mxu0 %v1456
    %2107 = vmatpush1.bf16.msra.mxu0 %v1455
    %2108 = vmatprep.subr.bf16.mxu0 %v1460
    %2109 = vmatpush1.bf16.msra.mxu0 %v1459
    %2110 = vmatprep.subr.bf16.mxu0 %v1464
    %2111 = vmatpush1.bf16.msra.mxu0 %v1463
    %2112 = vmatprep.subr.bf16.mxu0 %v1468
    %2113 = vmatpush1.bf16.msra.mxu0 %v1467
    %2114 = vmatprep.subr.bf16.mxu0 %v1472
    %2115 = vmatpush1.bf16.msra.mxu0 %v1471
    %2116 = vmatprep.subr.bf16.mxu0 %v1476
    %2117 = vmatpush1.bf16.msra.mxu0 %v1475
    %2118 = vmatprep.subr.bf16.mxu0 %v1480
    %2119 = vmatpush1.bf16.msra.mxu0 %v1479
    %2120 = vmatprep.subr.bf16.mxu0 %v1484
    %2121 = vmatpush1.bf16.msra.mxu0 %v1483
    %2122 = vmatprep.subr.bf16.mxu0 %v1488
    %2123 = vmatpush1.bf16.msra.mxu0 %v1487
    %2124 = vmatprep.subr.bf16.mxu0 %v1492
    %2125 = vmatpush1.bf16.msra.mxu0 %v1491
    %2126 = vmatprep.subr.bf16.mxu0 %v1496
    %2127 = vmatpush1.bf16.msra.mxu0 %v1495
    %2128 = vmatprep.subr.bf16.mxu0 %v1500
    %2129 = vmatpush1.bf16.msra.mxu0 %v1499
    %2130 = vmatprep.subr.bf16.mxu0 %v1504
    %2131 = vmatpush1.bf16.msra.mxu0 %v1503
    %2132 = vmatprep.subr.bf16.mxu0 %v1508
    %2133 = vmatpush1.bf16.msra.mxu0 %v1507
    %2134 = vmatprep.subr.bf16.mxu0 %v1512
    %2135 = vmatpush1.bf16.msra.mxu0 %v1511
    %2136 = vmatprep.subr.bf16.mxu0 %v1516
    %2137 = vmatpush1.bf16.msra.mxu0 %v1515
    %2138 = vmatprep.mubr.bf16.mxu0 %v338
    %2139 = vmatmul.mubr.bf16.gmra.mrb[0].mxu0 %v337
    %v2140 = vpop.f32.mrb[0].mxu0
    %v2141 = vadd.f32 %v2100, %v2140
    %v2142 = vpop.f32.mrb[0].mxu0
    %v2143 = vadd.f32 %v2102, %v2142
    %v2144 = vpop.f32.mrb[0].mxu0
    %v2145 = vpop.f32.mrb[0].mxu0
    %2146 = vdwg.mxu0
    %2147 = vmatprep.subr.bf16.mxu0 %v1520
    %2148 = vmatpush1.bf16.msra.mxu0 %v1519
    %2149 = vmatprep.subr.bf16.mxu0 %v1524
    %2150 = vmatpush1.bf16.msra.mxu0 %v1523
    %2151 = vmatprep.subr.bf16.mxu0 %v1528
    %2152 = vmatpush1.bf16.msra.mxu0 %v1527
    %2153 = vmatprep.subr.bf16.mxu0 %v1532
    %2154 = vmatpush1.bf16.msra.mxu0 %v1531
    %2155 = vmatprep.subr.bf16.mxu0 %v1536
    %2156 = vmatpush1.bf16.msra.mxu0 %v1535
    %2157 = vmatprep.subr.bf16.mxu0 %v1540
    %2158 = vmatpush1.bf16.msra.mxu0 %v1539
    %2159 = vmatprep.subr.bf16.mxu0 %v1544
    %2160 = vmatpush1.bf16.msra.mxu0 %v1543
    %2161 = vmatprep.subr.bf16.mxu0 %v1548
    %2162 = vmatpush1.bf16.msra.mxu0 %v1547
    %2163 = vmatprep.subr.bf16.mxu0 %v1552
    %2164 = vmatpush1.bf16.msra.mxu0 %v1551
    %2165 = vmatprep.subr.bf16.mxu0 %v1556
    %2166 = vmatpush1.bf16.msra.mxu0 %v1555
    %2167 = vmatprep.subr.bf16.mxu0 %v1560
    %2168 = vmatpush1.bf16.msra.mxu0 %v1559
    %2169 = vmatprep.subr.bf16.mxu0 %v1564
    %2170 = vmatpush1.bf16.msra.mxu0 %v1563
    %2171 = vmatprep.subr.bf16.mxu0 %v1568
    %2172 = vmatpush1.bf16.msra.mxu0 %v1567
    %2173 = vmatprep.subr.bf16.mxu0 %v1572
    %2174 = vmatpush1.bf16.msra.mxu0 %v1571
    %2175 = vmatprep.subr.bf16.mxu0 %v1576
    %2176 = vmatpush1.bf16.msra.mxu0 %v1575
    %2177 = vmatprep.subr.bf16.mxu0 %v1580
    %2178 = vmatpush1.bf16.msra.mxu0 %v1579
    %2179 = vmatprep.mubr.bf16.mxu0 %v340
    %2180 = vmatmul.mubr.bf16.gmra.mrb[0].mxu0 %v339
    %v2181 = vpop.f32.mrb[0].mxu0
    %v2182 = vadd.f32 %v2141, %v2181
    %v2183 = vpop.f32.mrb[0].mxu0
    %v2184 = vadd.f32 %v2143, %v2183
    %v2185 = vpop.f32.mrb[0].mxu0
    %v2186 = vpop.f32.mrb[0].mxu0
    %2187 = vdwg.mxu0
    %2188 = vmatprep.subr.bf16.mxu0 %v1584
    %2189 = vmatpush1.bf16.msra.mxu0 %v1583
    %2190 = vmatprep.subr.bf16.mxu0 %v1588
    %2191 = vmatpush1.bf16.msra.mxu0 %v1587
    %2192 = vmatprep.subr.bf16.mxu0 %v1592
    %2193 = vmatpush1.bf16.msra.mxu0 %v1591
    %2194 = vmatprep.subr.bf16.mxu0 %v1596
    %2195 = vmatpush1.bf16.msra.mxu0 %v1595
    %2196 = vmatprep.subr.bf16.mxu0 %v1600
    %2197 = vmatpush1.bf16.msra.mxu0 %v1599
    %2198 = vmatprep.subr.bf16.mxu0 %v1604
    %2199 = vmatpush1.bf16.msra.mxu0 %v1603
    %2200 = vmatprep.subr.bf16.mxu0 %v1608
    %2201 = vmatpush1.bf16.msra.mxu0 %v1607
    %2202 = vmatprep.subr.bf16.mxu0 %v1612
    %2203 = vmatpush1.bf16.msra.mxu0 %v1611
    %2204 = vmatprep.subr.bf16.mxu0 %v1616
    %2205 = vmatpush1.bf16.msra.mxu0 %v1615
    %2206 = vmatprep.subr.bf16.mxu0 %v1620
    %2207 = vmatpush1.bf16.msra.mxu0 %v1619
    %2208 = vmatprep.subr.bf16.mxu0 %v1624
    %2209 = vmatpush1.bf16.msra.mxu0 %v1623
    %2210 = vmatprep.subr.bf16.mxu0 %v1628
    %2211 = vmatpush1.bf16.msra.mxu0 %v1627
    %2212 = vmatprep.subr.bf16.mxu0 %v1632
    %2213 = vmatpush1.bf16.msra.mxu0 %v1631
    %2214 = vmatprep.subr.bf16.mxu0 %v1636
    %2215 = vmatpush1.bf16.msra.mxu0 %v1635
    %2216 = vmatprep.subr.bf16.mxu0 %v1640
    %2217 = vmatpush1.bf16.msra.mxu0 %v1639
    %2218 = vmatprep.subr.bf16.mxu0 %v1644
    %2219 = vmatpush1.bf16.msra.mxu0 %v1643
    %2220 = vmatprep.mubr.bf16.mxu0 %v342
    %2221 = vmatmul.mubr.bf16.gmra.mrb[0].mxu0 %v341
    %v2222 = vpop.f32.mrb[0].mxu0
    %v2223 = vadd.f32 %v2182, %v2222
    %v2224 = vpop.f32.mrb[0].mxu0
    %v2225 = vadd.f32 %v2184, %v2224
    %v2226 = vpop.f32.mrb[0].mxu0
    %v2227 = vpop.f32.mrb[0].mxu0
    %2228 = vdwg.mxu0
    %v2229 = vmax.f32 %v2059, 0.0
    %v2230 = vmax.f32 %v2061, 0.0
    %v2231 = vmax.f32 %v2223, 0.0
    %v2232 = vmax.f32 %v2225, 0.0
    %v2233 = vpack.c.bf16 %v2229, %v2229
    %v2234 = vpack.c.bf16 %v2230, %v2230
    %v2235 = vpack.c.bf16 %v2231, %v2231
    %v2236 = vpack.c.bf16 %v2232, %v2232
    %v2237 = vld [vmem:[#allocation6] sm:$0xf]
    %v2238 = vld [vmem:[#allocation6 + $0x4] sm:$0xf]
    %v2239 = vld [vmem:[#allocation6 + $0x8] sm:$0xf]
    %v2240 = vld [vmem:[#allocation6 + $0xc] sm:$0xf]
    %v2241 = vld [vmem:[#allocation6 + $0x10] sm:$0xf]
    %v2242 = vld [vmem:[#allocation6 + $0x14] sm:$0xf]
    %v2243 = vld [vmem:[#allocation6 + $0x18] sm:$0xf]
    %v2244 = vld [vmem:[#allocation6 + $0x1c] sm:$0xf]
    %v2245 = vld [vmem:[#allocation6 + $0x20] sm:$0xf]
    %v2246 = vld [vmem:[#allocation6 + $0x24] sm:$0xf]
    %v2247 = vld [vmem:[#allocation6 + $0x28] sm:$0xf]
    %v2248 = vld [vmem:[#allocation6 + $0x2c] sm:$0xf]
    %v2249 = vld [vmem:[#allocation6 + $0x30] sm:$0xf]
    %v2250 = vld [vmem:[#allocation6 + $0x34] sm:$0xf]
    %v2251 = vld [vmem:[#allocation6 + $0x38] sm:$0xf]
    %v2252 = vld [vmem:[#allocation6 + $0x3c] sm:$0xf]
    %v2253 = vld [vmem:[#allocation6 + $0x40] sm:$0xf]
    %v2254 = vld [vmem:[#allocation6 + $0x44] sm:$0xf]
    %v2255 = vld [vmem:[#allocation6 + $0x48] sm:$0xf]
    %v2256 = vld [vmem:[#allocation6 + $0x4c] sm:$0xf]
    %v2257 = vld [vmem:[#allocation6 + $0x50] sm:$0xf]
    %v2258 = vld [vmem:[#allocation6 + $0x54] sm:$0xf]
    %v2259 = vld [vmem:[#allocation6 + $0x58] sm:$0xf]
    %v2260 = vld [vmem:[#allocation6 + $0x5c] sm:$0xf]
    %v2261 = vld [vmem:[#allocation6 + $0x60] sm:$0xf]
    %v2262 = vld [vmem:[#allocation6 + $0x64] sm:$0xf]
    %v2263 = vld [vmem:[#allocation6 + $0x68] sm:$0xf]
    %v2264 = vld [vmem:[#allocation6 + $0x6c] sm:$0xf]
    %v2265 = vld [vmem:[#allocation6 + $0x70] sm:$0xf]
    %v2266 = vld [vmem:[#allocation6 + $0x74] sm:$0xf]
    %v2267 = vld [vmem:[#allocation6 + $0x78] sm:$0xf]
    %v2268 = vld [vmem:[#allocation6 + $0x7c] sm:$0xf]
    %v2269 = vld [vmem:[#allocation6 + $0x80] sm:$0xf]
    %v2270 = vld [vmem:[#allocation6 + $0x84] sm:$0xf]
    %v2271 = vld [vmem:[#allocation6 + $0x88] sm:$0xf]
    %v2272 = vld [vmem:[#allocation6 + $0x8c] sm:$0xf]
    %v2273 = vld [vmem:[#allocation6 + $0x90] sm:$0xf]
    %v2274 = vld [vmem:[#allocation6 + $0x94] sm:$0xf]
    %v2275 = vld [vmem:[#allocation6 + $0x98] sm:$0xf]
    %v2276 = vld [vmem:[#allocation6 + $0x9c] sm:$0xf]
    %v2277 = vld [vmem:[#allocation6 + $0xa0] sm:$0xf]
    %v2278 = vld [vmem:[#allocation6 + $0xa4] sm:$0xf]
    %v2279 = vld [vmem:[#allocation6 + $0xa8] sm:$0xf]
    %v2280 = vld [vmem:[#allocation6 + $0xac] sm:$0xf]
    %v2281 = vld [vmem:[#allocation6 + $0xb0] sm:$0xf]
    %v2282 = vld [vmem:[#allocation6 + $0xb4] sm:$0xf]
    %v2283 = vld [vmem:[#allocation6 + $0xb8] sm:$0xf]
    %v2284 = vld [vmem:[#allocation6 + $0xbc] sm:$0xf]
    %v2285 = vld [vmem:[#allocation6 + $0xc0] sm:$0xf]
    %v2286 = vld [vmem:[#allocation6 + $0xc4] sm:$0xf]
    %v2287 = vld [vmem:[#allocation6 + $0xc8] sm:$0xf]
    %v2288 = vld [vmem:[#allocation6 + $0xcc] sm:$0xf]
    %v2289 = vld [vmem:[#allocation6 + $0xd0] sm:$0xf]
    %v2290 = vld [vmem:[#allocation6 + $0xd4] sm:$0xf]
    %v2291 = vld [vmem:[#allocation6 + $0xd8] sm:$0xf]
    %v2292 = vld [vmem:[#allocation6 + $0xdc] sm:$0xf]
    %v2293 = vld [vmem:[#allocation6 + $0xe0] sm:$0xf]
    %v2294 = vld [vmem:[#allocation6 + $0xe4] sm:$0xf]
    %v2295 = vld [vmem:[#allocation6 + $0xe8] sm:$0xf]
    %v2296 = vld [vmem:[#allocation6 + $0xec] sm:$0xf]
    %v2297 = vld [vmem:[#allocation6 + $0xf0] sm:$0xf]
    %v2298 = vld [vmem:[#allocation6 + $0xf4] sm:$0xf]
    %v2299 = vld [vmem:[#allocation6 + $0xf8] sm:$0xf]
    %v2300 = vld [vmem:[#allocation6 + $0xfc] sm:$0xf]
    %v2301 = vld [vmem:[%s6] sm:$0x1]
    %v2303 = vlaneseq
    %v2304 = vshrl.u32 %v2303, 7
    %v2305 = vsub.s32 0, %v2304
    %v2306 = vrot.slane %v2301, %v2305
    %v2372 = vunpack.c.l.b16 %v2237
    %v2373 = vunpack.c.l.b16 %v2238
    %v2374 = vunpack.c.l.b16 %v2239
    %v2375 = vunpack.c.l.b16 %v2240
    %v2376 = vunpack.c.l.b16 %v2241
    %v2377 = vunpack.c.l.b16 %v2242
    %v2378 = vunpack.c.l.b16 %v2243
    %v2379 = vunpack.c.l.b16 %v2244
    %v2380 = vunpack.c.l.b16 %v2245
    %v2381 = vunpack.c.l.b16 %v2246
    %v2382 = vunpack.c.l.b16 %v2247
    %v2383 = vunpack.c.l.b16 %v2248
    %v2384 = vunpack.c.l.b16 %v2249
    %v2385 = vunpack.c.l.b16 %v2250
    %v2386 = vunpack.c.l.b16 %v2251
    %v2387 = vunpack.c.l.b16 %v2252
    %v2388 = vunpack.c.l.b16 %v2253
    %v2389 = vunpack.c.l.b16 %v2254
    %v2390 = vunpack.c.l.b16 %v2255
    %v2391 = vunpack.c.l.b16 %v2256
    %v2392 = vunpack.c.l.b16 %v2257
    %v2393 = vunpack.c.l.b16 %v2258
    %v2394 = vunpack.c.l.b16 %v2259
    %v2395 = vunpack.c.l.b16 %v2260
    %v2396 = vunpack.c.l.b16 %v2261
    %v2397 = vunpack.c.l.b16 %v2262
    %v2398 = vunpack.c.l.b16 %v2263
    %v2399 = vunpack.c.l.b16 %v2264
    %v2400 = vunpack.c.l.b16 %v2265
    %v2401 = vunpack.c.l.b16 %v2266
    %v2402 = vunpack.c.l.b16 %v2267
    %v2403 = vunpack.c.l.b16 %v2268
    %v2404 = vunpack.c.l.b16 %v2269
    %v2405 = vunpack.c.l.b16 %v2270
    %v2406 = vunpack.c.l.b16 %v2271
    %v2407 = vunpack.c.l.b16 %v2272
    %v2408 = vunpack.c.l.b16 %v2273
    %v2409 = vunpack.c.l.b16 %v2274
    %v2410 = vunpack.c.l.b16 %v2275
    %v2411 = vunpack.c.l.b16 %v2276
    %v2412 = vunpack.c.l.b16 %v2277
    %v2413 = vunpack.c.l.b16 %v2278
    %v2414 = vunpack.c.l.b16 %v2279
    %v2415 = vunpack.c.l.b16 %v2280
    %v2416 = vunpack.c.l.b16 %v2281
    %v2417 = vunpack.c.l.b16 %v2282
    %v2418 = vunpack.c.l.b16 %v2283
    %v2419 = vunpack.c.l.b16 %v2284
    %v2420 = vunpack.c.l.b16 %v2285
    %v2421 = vunpack.c.l.b16 %v2286
    %v2422 = vunpack.c.l.b16 %v2287
    %v2423 = vunpack.c.l.b16 %v2288
    %v2424 = vunpack.c.l.b16 %v2289
    %v2425 = vunpack.c.l.b16 %v2290
    %v2426 = vunpack.c.l.b16 %v2291
    %v2427 = vunpack.c.l.b16 %v2292
    %v2428 = vunpack.c.l.b16 %v2293
    %v2429 = vunpack.c.l.b16 %v2294
    %v2430 = vunpack.c.l.b16 %v2295
    %v2431 = vunpack.c.l.b16 %v2296
    %v2432 = vunpack.c.l.b16 %v2297
    %v2433 = vunpack.c.l.b16 %v2298
    %v2434 = vunpack.c.l.b16 %v2299
    %v2435 = vunpack.c.l.b16 %v2300
    %v2436 = vpack.c.b16 %v2373, %v2372
    %v2437 = vpack.c.b16 %v2375, %v2374
    %v2438 = vpack.c.b16 %v2377, %v2376
    %v2439 = vpack.c.b16 %v2379, %v2378
    %v2440 = vpack.c.b16 %v2381, %v2380
    %v2441 = vpack.c.b16 %v2383, %v2382
    %v2442 = vpack.c.b16 %v2385, %v2384
    %v2443 = vpack.c.b16 %v2387, %v2386
    %v2444 = vpack.c.b16 %v2389, %v2388
    %v2445 = vpack.c.b16 %v2391, %v2390
    %v2446 = vpack.c.b16 %v2393, %v2392
    %v2447 = vpack.c.b16 %v2395, %v2394
    %v2448 = vpack.c.b16 %v2397, %v2396
    %v2449 = vpack.c.b16 %v2399, %v2398
    %v2450 = vpack.c.b16 %v2401, %v2400
    %v2451 = vpack.c.b16 %v2403, %v2402
    %v2452 = vpack.c.b16 %v2405, %v2404
    %v2453 = vpack.c.b16 %v2407, %v2406
    %v2454 = vpack.c.b16 %v2409, %v2408
    %v2455 = vpack.c.b16 %v2411, %v2410
    %v2456 = vpack.c.b16 %v2413, %v2412
    %v2457 = vpack.c.b16 %v2415, %v2414
    %v2458 = vpack.c.b16 %v2417, %v2416
    %v2459 = vpack.c.b16 %v2419, %v2418
    %v2460 = vpack.c.b16 %v2421, %v2420
    %v2461 = vpack.c.b16 %v2423, %v2422
    %v2462 = vpack.c.b16 %v2425, %v2424
    %v2463 = vpack.c.b16 %v2427, %v2426
    %v2464 = vpack.c.b16 %v2429, %v2428
    %v2465 = vpack.c.b16 %v2431, %v2430
    %v2466 = vpack.c.b16 %v2433, %v2432
    %v2467 = vpack.c.b16 %v2435, %v2434
    %2500 = vmatprep.subr.bf16.mxu0 0
    %2501 = vmatpush1.bf16.msra.mxu0 %v2436
    %2502 = vmatprep.subr.bf16.mxu0 0
    %2503 = vmatpush1.bf16.msra.mxu0 %v2437
    %2504 = vmatprep.subr.bf16.mxu0 0
    %2505 = vmatpush1.bf16.msra.mxu0 %v2438
    %2506 = vmatprep.subr.bf16.mxu0 0
    %2507 = vmatpush1.bf16.msra.mxu0 %v2439
    %2508 = vmatprep.subr.bf16.mxu0 0
    %2509 = vmatpush1.bf16.msra.mxu0 %v2440
    %2510 = vmatprep.subr.bf16.mxu0 0
    %2511 = vmatpush1.bf16.msra.mxu0 %v2441
    %2512 = vmatprep.subr.bf16.mxu0 0
    %2513 = vmatpush1.bf16.msra.mxu0 %v2442
    %2514 = vmatprep.subr.bf16.mxu0 0
    %2515 = vmatpush1.bf16.msra.mxu0 %v2443
    %2516 = vmatprep.subr.bf16.mxu0 0
    %2517 = vmatpush1.bf16.msra.mxu0 %v2444
    %2518 = vmatprep.subr.bf16.mxu0 0
    %2519 = vmatpush1.bf16.msra.mxu0 %v2445
    %2520 = vmatprep.subr.bf16.mxu0 0
    %2521 = vmatpush1.bf16.msra.mxu0 %v2446
    %2522 = vmatprep.subr.bf16.mxu0 0
    %2523 = vmatpush1.bf16.msra.mxu0 %v2447
    %2524 = vmatprep.subr.bf16.mxu0 0
    %2525 = vmatpush1.bf16.msra.mxu0 %v2448
    %2526 = vmatprep.subr.bf16.mxu0 0
    %2527 = vmatpush1.bf16.msra.mxu0 %v2449
    %2528 = vmatprep.subr.bf16.mxu0 0
    %2529 = vmatpush1.bf16.msra.mxu0 %v2450
    %2530 = vmatprep.subr.bf16.mxu0 0
    %2531 = vmatpush1.bf16.msra.mxu0 %v2451
    %2532 = vmatprep.mubr.bf16.mxu0 %v2234
    %2533 = vmatmul.mubr.bf16.gmra.mrb[0].mxu0 %v2233
    %v2534 = vpop.f32.mrb[0].mxu0
    %v2535 = vadd.f32 %v2306, %v2534
    %v2536 = vpop.f32.mrb[0].mxu0
    %v2537 = vpop.f32.mrb[0].mxu0
    %v2538 = vpop.f32.mrb[0].mxu0
    %2539 = vdwg.mxu0
    %2540 = vmatprep.subr.bf16.mxu0 0
    %2541 = vmatpush1.bf16.msra.mxu0 %v2452
    %2542 = vmatprep.subr.bf16.mxu0 0
    %2543 = vmatpush1.bf16.msra.mxu0 %v2453
    %2544 = vmatprep.subr.bf16.mxu0 0
    %2545 = vmatpush1.bf16.msra.mxu0 %v2454
    %2546 = vmatprep.subr.bf16.mxu0 0
    %2547 = vmatpush1.bf16.msra.mxu0 %v2455
    %2548 = vmatprep.subr.bf16.mxu0 0
    %2549 = vmatpush1.bf16.msra.mxu0 %v2456
    %2550 = vmatprep.subr.bf16.mxu0 0
    %2551 = vmatpush1.bf16.msra.mxu0 %v2457
    %2552 = vmatprep.subr.bf16.mxu0 0
    %2553 = vmatpush1.bf16.msra.mxu0 %v2458
    %2554 = vmatprep.subr.bf16.mxu0 0
    %2555 = vmatpush1.bf16.msra.mxu0 %v2459
    %2556 = vmatprep.subr.bf16.mxu0 0
    %2557 = vmatpush1.bf16.msra.mxu0 %v2460
    %2558 = vmatprep.subr.bf16.mxu0 0
    %2559 = vmatpush1.bf16.msra.mxu0 %v2461
    %2560 = vmatprep.subr.bf16.mxu0 0
    %2561 = vmatpush1.bf16.msra.mxu0 %v2462
    %2562 = vmatprep.subr.bf16.mxu0 0
    %2563 = vmatpush1.bf16.msra.mxu0 %v2463
    %2564 = vmatprep.subr.bf16.mxu0 0
    %2565 = vmatpush1.bf16.msra.mxu0 %v2464
    %2566 = vmatprep.subr.bf16.mxu0 0
    %2567 = vmatpush1.bf16.msra.mxu0 %v2465
    %2568 = vmatprep.subr.bf16.mxu0 0
    %2569 = vmatpush1.bf16.msra.mxu0 %v2466
    %2570 = vmatprep.subr.bf16.mxu0 0
    %2571 = vmatpush1.bf16.msra.mxu0 %v2467
    %2572 = vmatprep.mubr.bf16.mxu0 %v2236
    %2573 = vmatmul.mubr.bf16.gmra.mrb[0].mxu0 %v2235
    %v2574 = vpop.f32.mrb[0].mxu0
    %v2575 = vadd.f32 %v2535, %v2574
    %v2576 = vpop.f32.mrb[0].mxu0
    %v2577 = vpop.f32.mrb[0].mxu0
    %v2578 = vpop.f32.mrb[0].mxu0
    %2579 = vdwg.mxu0
    %2580 = vst [vmem:[%s7] sm:$0xff] %v2575
    // Predicated region
    $region42: #{network_forward.1} parent=1 // pred_check
      _
    $region43: #{network_forward.1} parent=1 // pred_check_branch
      %2582 = sbr.rel (0) target = $region45
    $region44: #{network_forward.1} parent=1 // pred_region
      _
    $region45: #{network_forward.1} parent=1 // pred_fallthru
      _
    // Predicated region
    $region46: #{network_forward.1} parent=1 // pred_check
      _
    $region47: #{network_forward.1} parent=1 // pred_check_branch
      %2584 = sbr.rel (0) target = $region49
    $region48: #{network_forward.1} parent=1 // pred_region
      _
    $region49: #{network_forward.1} parent=1 // pred_fallthru
      _
    %2585 = vsyncpa [#allocation3], 1
    %2586 = vsyncpa [#allocation5], 1

</llo_original>
